<compile_context>
chip_gen: v5e
topology: v5e:2x2
jax: 0.10.0
libtpu: 0.0.40
codegen_flags: <defaults>
</compile_context>

<pallas_src>
import jax
import jax.numpy as jnp
from jax.experimental import pallas as pl
from jax.experimental.pallas import tpu as pltpu

OUT = 8            # true number of output features
OUT_PAD = 128      # lane-dense padded output width (sliced back in wrapper)


def _round_up(x, m):
    return ((x + m - 1) // m) * m


def _vmem_capacity_bytes():
    """Best-effort per-core VMEM capacity; falls back to v7x's 64 MiB."""
    cap = 64 * 1024 * 1024
    try:
        info = pltpu.get_tpu_info()
        cap = int(getattr(info, "vmem_capacity_bytes", cap))
    except Exception:
        pass
    return cap


# ----------------------------- Pallas kernel --------------------------------
def _make_fc_kernel(prelu_slope, bt):
    """Build the kernel for grid = (batch_tiles, k_tiles); K = reduction axis."""

    def kernel(x1_ref, x2_ref, w1_ref, b1_ref, w2_ref, b2_ref, w3_ref, b3_ref,
               o1_ref, o2_ref, acc_ref):
        k = pl.program_id(1)
        nk = pl.num_programs(1)

        @pl.when(k == 0)
        def _zero():
            acc_ref[...] = jnp.zeros_like(acc_ref)

        # Fused siamese branches: concatenate the two (bt, Kt) activation
        # tiles along rows -> one MXU issue per K tile, one w1 DMA feeds both.
        x = jnp.concatenate(
            [x1_ref[...].astype(jnp.bfloat16),
             x2_ref[...].astype(jnp.bfloat16)], axis=0)            # (2*bt, Kt)
        acc_ref[...] += jnp.dot(x, w1_ref[...],
                                preferred_element_type=jnp.float32)

        @pl.when(k == nk - 1)
        def _finalize():
            # Linear-1 bias (BatchNorm1d eval folded in) + ReLU, applied once.
            h1 = jnp.maximum(acc_ref[...] + b1_ref[...], 0.0)      # (2*bt, H1)
            # Linear(H1, H2); Dropout(0.2) is identity at inference.
            h2 = jnp.dot(h1.astype(jnp.bfloat16), w2_ref[...],
                         preferred_element_type=jnp.float32) + b2_ref[...]
            # PReLU(1): single shared slope, closed over as a constant.
            h2 = jnp.where(h2 > 0, h2, prelu_slope * h2)
            # Linear(H2, OUT) -- w3/b3 zero-padded to OUT_PAD lanes so the
            # stores are full, unmasked (bt, 128) slabs.
            out = jnp.dot(h2.astype(jnp.bfloat16), w3_ref[...],
                          preferred_element_type=jnp.float32) + b3_ref[...]
            o1_ref[...] = out[:bt]
            o2_ref[...] = out[bt:]

    return kernel


# ------------------------------ JAX wrapper ----------------------------------
def _run_fc(x1, x2, kparams, *, batch_tile=None, k_tile=None):
    """x1, x2: (N, D) f32 activations. Returns two (N, OUT_PAD) f32 arrays."""
    (w1, b1, w2, b2, prelu_a, w3, b3) = kparams
    N, D = x1.shape
    H1 = w1.shape[1]
    H2 = w2.shape[1]

    vmem_cap = _vmem_capacity_bytes()
    big_vmem = vmem_cap >= 100 * 1024 * 1024          # v5e/v6e (128 MiB) vs v7x (64 MiB)

    # Batch tile: multiple of 16 (bf16 sublane packing of the fused 2*bt rows);
    # larger on v5e/v6e where more VMEM is available.
    if batch_tile is None:
        batch_tile = 512 if big_vmem else 256
    bt = min(batch_tile, _round_up(N, 16))
    bt = _round_up(bt, 16)
    NP = _round_up(N, bt)

    # K tile over D: multiple of 128 lanes, sized so the double-buffered
    # (Kt, H1) bf16 w1 slabs fit roughly half the per-generation VMEM budget.
    if k_tile is None:
        budget = vmem_cap // 2
        k_tile = max(128, (budget // (2 * H1 * 2) // 128) * 128)   # 2 bufs, bf16
    kt = max(128, _round_up(min(k_tile, _round_up(D, 128)), 128))
    Dp = _round_up(D, kt)

    # Minimal zero padding (padded rows are sliced away by the caller; padded
    # D columns multiply padded zero rows of w1, contributing nothing).
    # Activations stay f32 here; the bf16 cast happens inside the kernel.
    if NP != N or Dp != D:
        x1 = jnp.pad(x1, ((0, NP - N), (0, Dp - D)))
        x2 = jnp.pad(x2, ((0, NP - N), (0, Dp - D)))
    w1p = jnp.pad(w1, ((0, Dp - D), (0, 0))) if Dp != D else w1

    grid = (NP // bt, Dp // kt)
    kernel = _make_fc_kernel(float(prelu_a[0]), bt)

    flops = 2 * (2 * NP) * (Dp * H1 + H1 * H2 + H2 * OUT_PAD)
    bytes_accessed = (2 * NP * Dp * 4 + 2 * NP * OUT_PAD * 4
                      + Dp * H1 * 2 + H1 * H2 * 2 + H2 * OUT_PAD * 2
                      + (H1 + H2 + OUT_PAD) * 4)

    vmem_limit = max(32 * 1024 * 1024,
                     min(vmem_cap - 8 * 1024 * 1024, 112 * 1024 * 1024))

    def _call(single_buffer_consts):
        pm = pl.Buffered(1) if single_buffer_consts else None

        def const_spec(shape):
            # Grid-constant operand: same block for every (i, k).
            return pl.BlockSpec(shape, lambda i, k: (0,) * len(shape),
                                pipeline_mode=pm)

        in_specs = [
            pl.BlockSpec((bt, kt), lambda i, k: (i, k)),        # x1 batch/K tile
            pl.BlockSpec((bt, kt), lambda i, k: (i, k)),        # x2 batch/K tile
            pl.BlockSpec((kt, H1), lambda i, k: (k, 0)),        # w1 K-slab (streamed)
            const_spec((1, H1)),                                # b1 (BN folded, f32)
            const_spec((H1, H2)),                               # w2 (bf16)
            const_spec((1, H2)),                                # b2 (f32)
            const_spec((H2, OUT_PAD)),                          # w3 (bf16, lane-padded)
            const_spec((1, OUT_PAD)),                           # b3 (f32, lane-padded)
        ]

        return pl.pallas_call(
            kernel,
            out_shape=(jax.ShapeDtypeStruct((NP, OUT_PAD), jnp.float32),
                       jax.ShapeDtypeStruct((NP, OUT_PAD), jnp.float32)),
            grid_spec=pltpu.PrefetchScalarGridSpec(
                num_scalar_prefetch=0,
                grid=grid,
                in_specs=in_specs,
                out_specs=[
                    pl.BlockSpec((bt, OUT_PAD), lambda i, k: (i, 0)),
                    pl.BlockSpec((bt, OUT_PAD), lambda i, k: (i, 0)),
                ],
                scratch_shapes=[pltpu.VMEM((2 * bt, H1), jnp.float32)],
            ),
            compiler_params=pltpu.CompilerParams(
                dimension_semantics=("parallel", "arbitrary"),
                vmem_limit_bytes=vmem_limit),
            cost_estimate=pl.CostEstimate(flops=flops, transcendentals=0,
                                          bytes_accessed=bytes_accessed),
        )(x1, x2, w1p, b1, w2, b2, w3, b3)

    try:
        out1, out2 = _call(single_buffer_consts=True)
    except Exception:
        # pl.Buffered(1) single-buffering of grid-constant operands is an
        # optimization only; fall back to default double buffering if this
        # JAX/Mosaic version rejects it.
        out1, out2 = _call(single_buffer_consts=False)

    return out1[:N], out2[:N]


def fc_siamese_net(input1, input2, kparams, *, batch_tile=None, k_tile=None):
    """input1, input2: (B, C, H, W).  Returns (output1, output2), each (B, 8)."""
    B = input1.shape[0]
    f1 = input1.reshape(B, -1)
    f2 = input2.reshape(B, -1)
    o1, o2 = _run_fc(f1, f2, kparams, batch_tile=batch_tile, k_tile=k_tile)
    return o1[:, :OUT], o2[:, :OUT]


# ------------------------- deterministic parameters --------------------------
def make_params(key, D, H1, H2, out):
    """Raw module parameters, f32, weights already in (in, out) layout."""
    ks = jax.random.split(key, 10)
    uni = lambda k, shape, fan_in: jax.random.uniform(
        k, shape, jnp.float32, -1.0 / jnp.sqrt(fan_in), 1.0 / jnp.sqrt(fan_in))

    return dict(
        w1=uni(ks[0], (D, H1), D),
        b1=uni(ks[1], (1, H1), D),
        w2=uni(ks[2], (H1, H2), H1),
        b2=uni(ks[3], (1, H2), H1),
        w3=uni(ks[4], (H2, out), H2),
        b3=uni(ks[5], (1, out), H2),
        gamma=1.0 + 0.1 * jax.random.normal(ks[6], (1, H1), jnp.float32),
        beta=0.1 * jax.random.normal(ks[7], (1, H1), jnp.float32),
        mean=0.05 * jax.random.normal(ks[8], (1, H1), jnp.float32),
        var=jnp.abs(1.0 + 0.1 * jax.random.normal(ks[9], (1, H1), jnp.float32)),
        eps=1e-5,
        prelu=jnp.full((1,), 0.25, jnp.float32),   # PyTorch PReLU(1) default
    )


def prepare_kernel_params(p):
    """Fold BN(eval) into Linear-1, cast matmul weights to bf16, lane-pad the
    final 8-wide layer to OUT_PAD columns."""
    scale = p["gamma"] / jnp.sqrt(p["var"] + p["eps"])          # (1, H1)
    shift = p["beta"] - p["mean"] * scale
    w1f = (p["w1"] * scale).astype(jnp.bfloat16)                # (D, H1)
    b1f = (p["b1"] * scale + shift).astype(jnp.float32)
    w2 = p["w2"].astype(jnp.bfloat16)
    b2 = p["b2"].astype(jnp.float32)
    nout = p["w3"].shape[1]
    w3 = jnp.zeros((p["w3"].shape[0], OUT_PAD), jnp.bfloat16)
    w3 = w3.at[:, :nout].set(p["w3"].astype(jnp.bfloat16))
    b3 = jnp.zeros((1, OUT_PAD), jnp.float32).at[:, :nout].set(p["b3"])
    return (w1f, b1f, w2, b2, p["prelu"], w3, b3)


# ---------------------------------- main --------------------------------------
if __name__ == "__main__":
    # Small shapes consistent with the module structure
    # (real net: D = prod(RES34_960x720_SHAPE), H1 = 2048, H2 = 256, OUT = 8).
    B, C, H, W = 2, 4, 16, 16
    D = C * H * W              # 1024 flattened input features
    H1, H2 = 256, 128

    key = jax.random.PRNGKey(0)
    k_in1, k_in2, k_par = jax.random.split(key, 3)
    input1 = jax.random.normal(k_in1, (B, C, H, W), jnp.float32)
    input2 = jax.random.normal(k_in2, (B, C, H, W), jnp.float32)

    raw = make_params(k_par, D, H1, H2, OUT)
    kparams = prepare_kernel_params(raw)

    # k_tile=256 exercises the streamed-w1 K reduction (4 steps over D=1024).
    out1, out2 = fc_siamese_net(input1, input2, kparams, k_tile=256)
    jax.block_until_ready((out1, out2))
    assert out1.shape == (B, OUT) and out2.shape == (B, OUT)

    # Reference 1: identical numerics to the kernel (bf16 matmul inputs,
    # f32 accumulation, folded BN) -- tight tolerance.
    def ref_exact(x):
        w1, b1, w2, b2, a, w3, b3 = kparams
        f = x.reshape(x.shape[0], -1).astype(jnp.bfloat16)
        h1 = jnp.maximum(
            jnp.dot(f, w1, preferred_element_type=jnp.float32) + b1, 0.0)
        h2 = jnp.dot(h1.astype(jnp.bfloat16), w2,
                     preferred_element_type=jnp.float32) + b2
        h2 = jnp.where(h2 > 0, h2, a[0] * h2)
        o = jnp.dot(h2.astype(jnp.bfloat16), w3,
                    preferred_element_type=jnp.float32) + b3
        return o[:, :OUT]

    r1, r2 = ref_exact(input1), ref_exact(input2)
    assert jnp.allclose(out1, r1, atol=2e-3, rtol=2e-3)
    assert jnp.allclose(out2, r2, atol=2e-3, rtol=2e-3)

    # Reference 2: full-f32, unfolded module semantics
    # (Linear -> BN(eval) -> ReLU -> Linear -> Dropout(id) -> PReLU -> Linear).
    def ref_f32(x):
        f = x.reshape(x.shape[0], -1)
        h1 = f @ raw["w1"] + raw["b1"]
        h1 = ((h1 - raw["mean"]) / jnp.sqrt(raw["var"] + raw["eps"])
              * raw["gamma"] + raw["beta"])
        h1 = jnp.maximum(h1, 0.0)
        h2 = h1 @ raw["w2"] + raw["b2"]
        h2 = jnp.maximum(h2, 0.0) + raw["prelu"][0] * jnp.minimum(h2, 0.0)
        return h2 @ raw["w3"] + raw["b3"]

    s1, s2 = ref_f32(input1), ref_f32(input2)
    assert jnp.allclose(out1, s1, atol=5e-2, rtol=5e-2)   # bf16 rounding budget
    assert jnp.allclose(out2, s2, atol=5e-2, rtol=5e-2)

    print("KERNEL_OK")
</pallas_src>

<mosaic_0001>
module attributes {stable_mosaic.version = 11 : i64} {
  func.func @kernel(%arg0: i32, %arg1: i32, %arg2: memref<16x256xf32, #tpu.memory_space<vmem>>, %arg3: memref<16x256xf32, #tpu.memory_space<vmem>>, %arg4: memref<256x256xbf16, #tpu.memory_space<vmem>>, %arg5: memref<1x256xf32, #tpu.memory_space<vmem>>, %arg6: memref<256x128xbf16, #tpu.memory_space<vmem>>, %arg7: memref<1x128xf32, #tpu.memory_space<vmem>>, %arg8: memref<128x128xbf16, #tpu.memory_space<vmem>>, %arg9: memref<1x128xf32, #tpu.memory_space<vmem>>, %arg10: memref<16x128xf32, #tpu.memory_space<vmem>>, %arg11: memref<16x128xf32, #tpu.memory_space<vmem>>, %arg12: memref<32x256xf32, #tpu.memory_space<vmem>>) attributes {dimension_semantics = [#tpu.dimension_semantics<parallel>, #tpu.dimension_semantics<arbitrary>], iteration_bounds = array<i64: 1, 4>, scalar_prefetch = 0 : i64, scratch_operands = 1 : i64, tpu.core_type = #tpu.core_type<tc>, window_params = [{transform_indices = @transform_0, window_bounds = array<i64: 16, 256>}, {transform_indices = @transform_1, window_bounds = array<i64: 16, 256>}, {transform_indices = @transform_2, window_bounds = array<i64: 256, 256>}, {pipeline_mode = #tpu.pipeline_mode<synchronous>, transform_indices = @transform_3, window_bounds = array<i64: 1, 256>}, {pipeline_mode = #tpu.pipeline_mode<synchronous>, transform_indices = @transform_4, window_bounds = array<i64: 256, 128>}, {pipeline_mode = #tpu.pipeline_mode<synchronous>, transform_indices = @transform_5, window_bounds = array<i64: 1, 128>}, {pipeline_mode = #tpu.pipeline_mode<synchronous>, transform_indices = @transform_6, window_bounds = array<i64: 128, 128>}, {pipeline_mode = #tpu.pipeline_mode<synchronous>, transform_indices = @transform_7, window_bounds = array<i64: 1, 128>}, {transform_indices = @transform_8, window_bounds = array<i64: 16, 128>}, {transform_indices = @transform_9, window_bounds = array<i64: 16, 128>}]} {
    %c0_i32 = arith.constant 0 : i32
    %0 = arith.cmpi eq, %arg1, %c0_i32 : i32
    %1 = arith.extui %0 : i1 to i32
    %c0_i32_0 = arith.constant 0 : i32
    %2 = arith.cmpi ne, %1, %c0_i32_0 : i32
    scf.if %2 {
      %cst_11 = arith.constant 0.000000e+00 : f32
      %16 = vector.broadcast %cst_11 : f32 to vector<32x256xf32>
      %c0_12 = arith.constant 0 : index
      %c0_13 = arith.constant 0 : index
      %17 = vector.load %arg12[%c0_12, %c0_13] : memref<32x256xf32, #tpu.memory_space<vmem>>, vector<32x256xf32>
      tpu.vector_store %arg12[%c0_12, %c0_13], %16 {strides = array<i32>} : memref<32x256xf32, #tpu.memory_space<vmem>>, vector<32x256xf32>,
    } else {
    }
    %c0 = arith.constant 0 : index
    %c0_1 = arith.constant 0 : index
    %3 = vector.load %arg2[%c0, %c0_1] : memref<16x256xf32, #tpu.memory_space<vmem>>, vector<16x256xf32>
    %4 = arith.truncf %3 : vector<16x256xf32> to vector<16x256xbf16>
    %c0_2 = arith.constant 0 : index
    %c0_3 = arith.constant 0 : index
    %5 = vector.load %arg3[%c0_2, %c0_3] : memref<16x256xf32, #tpu.memory_space<vmem>>, vector<16x256xf32>
    %6 = arith.truncf %5 : vector<16x256xf32> to vector<16x256xbf16>
    %7 = tpu.concatenate %4, %6 in 0 : vector<16x256xbf16>, vector<16x256xbf16> -> vector<32x256xbf16>
    %c0_4 = arith.constant 0 : index
    %c0_5 = arith.constant 0 : index
    %8 = vector.load %arg12[%c0_4, %c0_5] : memref<32x256xf32, #tpu.memory_space<vmem>>, vector<32x256xf32>
    %c0_6 = arith.constant 0 : index
    %c0_7 = arith.constant 0 : index
    %9 = vector.load %arg4[%c0_6, %c0_7] : memref<256x256xbf16, #tpu.memory_space<vmem>>, vector<256x256xbf16>
    %cst = arith.constant dense<0.000000e+00> : vector<32x256xf32>
    %10 = tpu.matmul %7, %9, %cst {dimension_numbers = #tpu.dot_dimension_numbers<[1], [0], [0], [1], [0, 0, 1, 1], [], []>} : vector<32x256xbf16>, vector<256x256xbf16>, vector<32x256xf32> -> vector<32x256xf32>
    %11 = arith.addf %8, %10 : vector<32x256xf32>
    %c0_8 = arith.constant 0 : index
    %c0_9 = arith.constant 0 : index
    %12 = vector.load %arg12[%c0_8, %c0_9] : memref<32x256xf32, #tpu.memory_space<vmem>>, vector<32x256xf32>
    tpu.vector_store %arg12[%c0_8, %c0_9], %11 {strides = array<i32>} : memref<32x256xf32, #tpu.memory_space<vmem>>, vector<32x256xf32>,
    %c3_i32 = arith.constant 3 : i32
    %13 = arith.cmpi eq, %arg1, %c3_i32 : i32
    %14 = arith.extui %13 : i1 to i32
    %c0_i32_10 = arith.constant 0 : i32
    %15 = arith.cmpi ne, %14, %c0_i32_10 : i32
    scf.if %15 {
      %c0_11 = arith.constant 0 : index
      %c0_12 = arith.constant 0 : index
      %16 = vector.load %arg12[%c0_11, %c0_12] : memref<32x256xf32, #tpu.memory_space<vmem>>, vector<32x256xf32>
      %c0_13 = arith.constant 0 : index
      %c0_14 = arith.constant 0 : index
      %17 = vector.load %arg5[%c0_13, %c0_14] : memref<1x256xf32, #tpu.memory_space<vmem>>, vector<1x256xf32>
      %18 = vector.broadcast %17 : vector<1x256xf32> to vector<32x256xf32>
      %19 = arith.addf %16, %18 : vector<32x256xf32>
      %cst_15 = arith.constant 0.000000e+00 : f32
      %20 = vector.broadcast %cst_15 : f32 to vector<32x256xf32>
      %21 = arith.maximumf %19, %20 : vector<32x256xf32>
      %22 = arith.truncf %21 : vector<32x256xf32> to vector<32x256xbf16>
      %c0_16 = arith.constant 0 : index
      %c0_17 = arith.constant 0 : index
      %23 = vector.load %arg6[%c0_16, %c0_17] : memref<256x128xbf16, #tpu.memory_space<vmem>>, vector<256x128xbf16>
      %cst_18 = arith.constant dense<0.000000e+00> : vector<32x128xf32>
      %24 = tpu.matmul %22, %23, %cst_18 {dimension_numbers = #tpu.dot_dimension_numbers<[1], [0], [0], [1], [0, 0, 1, 1], [], []>} : vector<32x256xbf16>, vector<256x128xbf16>, vector<32x128xf32> -> vector<32x128xf32>
      %c0_19 = arith.constant 0 : index
      %c0_20 = arith.constant 0 : index
      %25 = vector.load %arg7[%c0_19, %c0_20] : memref<1x128xf32, #tpu.memory_space<vmem>>, vector<1x128xf32>
      %26 = vector.broadcast %25 : vector<1x128xf32> to vector<32x128xf32>
      %27 = arith.addf %24, %26 : vector<32x128xf32>
      %cst_21 = arith.constant 0.000000e+00 : f32
      %28 = vector.broadcast %cst_21 : f32 to vector<32x128xf32>
      %29 = arith.cmpf ogt, %27, %28 : vector<32x128xf32>
      %cst_22 = arith.constant 2.500000e-01 : f32
      %30 = vector.broadcast %cst_22 : f32 to vector<32x128xf32>
      %31 = arith.mulf %30, %27 : vector<32x128xf32>
      %32 = arith.select %29, %27, %31 : vector<32x128xi1>, vector<32x128xf32>
      %33 = arith.truncf %32 : vector<32x128xf32> to vector<32x128xbf16>
      %c0_23 = arith.constant 0 : index
      %c0_24 = arith.constant 0 : index
      %34 = vector.load %arg8[%c0_23, %c0_24] : memref<128x128xbf16, #tpu.memory_space<vmem>>, vector<128x128xbf16>
      %cst_25 = arith.constant dense<0.000000e+00> : vector<32x128xf32>
      %35 = tpu.matmul %33, %34, %cst_25 {dimension_numbers = #tpu.dot_dimension_numbers<[1], [0], [0], [1], [0, 0, 1, 1], [], []>} : vector<32x128xbf16>, vector<128x128xbf16>, vector<32x128xf32> -> vector<32x128xf32>
      %c0_26 = arith.constant 0 : index
      %c0_27 = arith.constant 0 : index
      %36 = vector.load %arg9[%c0_26, %c0_27] : memref<1x128xf32, #tpu.memory_space<vmem>>, vector<1x128xf32>
      %37 = vector.broadcast %36 : vector<1x128xf32> to vector<32x128xf32>
      %38 = arith.addf %35, %37 : vector<32x128xf32>
      %39 = vector.extract_strided_slice %38 {offsets = [0, 0], sizes = [16, 128], strides = [1, 1]} : vector<32x128xf32> to vector<16x128xf32>
      %c0_28 = arith.constant 0 : index
      %c0_29 = arith.constant 0 : index
      %40 = vector.load %arg10[%c0_28, %c0_29] : memref<16x128xf32, #tpu.memory_space<vmem>>, vector<16x128xf32>
      tpu.vector_store %arg10[%c0_28, %c0_29], %39 {strides = array<i32>} : memref<16x128xf32, #tpu.memory_space<vmem>>, vector<16x128xf32>,
      %41 = vector.extract_strided_slice %38 {offsets = [16, 0], sizes = [16, 128], strides = [1, 1]} : vector<32x128xf32> to vector<16x128xf32>
      %c0_30 = arith.constant 0 : index
      %c0_31 = arith.constant 0 : index
      %42 = vector.load %arg11[%c0_30, %c0_31] : memref<16x128xf32, #tpu.memory_space<vmem>>, vector<16x128xf32>
      tpu.vector_store %arg11[%c0_30, %c0_31], %41 {strides = array<i32>} : memref<16x128xf32, #tpu.memory_space<vmem>>, vector<16x128xf32>,
    } else {
    }
    return
  }
  func.func @transform_0(%arg0: i32, %arg1: i32) -> (i32, i32) {
    %c0_i32 = arith.constant 0 : i32
    return %arg0, %arg1 : i32, i32
  }
  func.func @transform_1(%arg0: i32, %arg1: i32) -> (i32, i32) {
    %c0_i32 = arith.constant 0 : i32
    return %arg0, %arg1 : i32, i32
  }
  func.func @transform_2(%arg0: i32, %arg1: i32) -> (i32, i32) {
    %c0_i32 = arith.constant 0 : i32
    %c0_i32_0 = arith.constant 0 : i32
    return %arg1, %c0_i32 : i32, i32
  }
  func.func @transform_3(%arg0: i32, %arg1: i32) -> (i32, i32) {
    %c0_i32 = arith.constant 0 : i32
    %c0_i32_0 = arith.constant 0 : i32
    %c0_i32_1 = arith.constant 0 : i32
    return %c0_i32, %c0_i32_0 : i32, i32
  }
  func.func @transform_4(%arg0: i32, %arg1: i32) -> (i32, i32) {
    %c0_i32 = arith.constant 0 : i32
    %c0_i32_0 = arith.constant 0 : i32
    %c0_i32_1 = arith.constant 0 : i32
    return %c0_i32, %c0_i32_0 : i32, i32
  }
  func.func @transform_5(%arg0: i32, %arg1: i32) -> (i32, i32) {
    %c0_i32 = arith.constant 0 : i32
    %c0_i32_0 = arith.constant 0 : i32
    %c0_i32_1 = arith.constant 0 : i32
    return %c0_i32, %c0_i32_0 : i32, i32
  }
  func.func @transform_6(%arg0: i32, %arg1: i32) -> (i32, i32) {
    %c0_i32 = arith.constant 0 : i32
    %c0_i32_0 = arith.constant 0 : i32
    %c0_i32_1 = arith.constant 0 : i32
    return %c0_i32, %c0_i32_0 : i32, i32
  }
  func.func @transform_7(%arg0: i32, %arg1: i32) -> (i32, i32) {
    %c0_i32 = arith.constant 0 : i32
    %c0_i32_0 = arith.constant 0 : i32
    %c0_i32_1 = arith.constant 0 : i32
    return %c0_i32, %c0_i32_0 : i32, i32
  }
  func.func @transform_8(%arg0: i32, %arg1: i32) -> (i32, i32) {
    %c0_i32 = arith.constant 0 : i32
    %c0_i32_0 = arith.constant 0 : i32
    return %arg0, %c0_i32 : i32, i32
  }
  func.func @transform_9(%arg0: i32, %arg1: i32) -> (i32, i32) {
    %c0_i32 = arith.constant 0 : i32
    %c0_i32_0 = arith.constant 0 : i32
    return %arg0, %c0_i32 : i32, i32
  }
}

module attributes {stable_mosaic.version = 11 : i64} {
  func.func @kernel(%arg0: i32, %arg1: i32, %arg2: memref<16x256xf32, #tpu.memory_space<vmem>>, %arg3: memref<16x256xf32, #tpu.memory_space<vmem>>, %arg4: memref<256x256xbf16, #tpu.memory_space<vmem>>, %arg5: memref<1x256xf32, #tpu.memory_space<vmem>>, %arg6: memref<256x128xbf16, #tpu.memory_space<vmem>>, %arg7: memref<1x128xf32, #tpu.memory_space<vmem>>, %arg8: memref<128x128xbf16, #tpu.memory_space<vmem>>, %arg9: memref<1x128xf32, #tpu.memory_space<vmem>>, %arg10: memref<16x128xf32, #tpu.memory_space<vmem>>, %arg11: memref<16x128xf32, #tpu.memory_space<vmem>>, %arg12: memref<32x256xf32, #tpu.memory_space<vmem>>) attributes {dimension_semantics = [#tpu.dimension_semantics<parallel>, #tpu.dimension_semantics<arbitrary>], iteration_bounds = array<i64: 1, 4>, scalar_prefetch = 0 : i64, scratch_operands = 1 : i64, tpu.core_type = #tpu.core_type<tc>, window_params = [{transform_indices = @transform_0, window_bounds = array<i64: 16, 256>}, {transform_indices = @transform_1, window_bounds = array<i64: 16, 256>}, {transform_indices = @transform_2, window_bounds = array<i64: 256, 256>}, {pipeline_mode = #tpu.pipeline_mode<synchronous>, transform_indices = @transform_3, window_bounds = array<i64: 1, 256>}, {pipeline_mode = #tpu.pipeline_mode<synchronous>, transform_indices = @transform_4, window_bounds = array<i64: 256, 128>}, {pipeline_mode = #tpu.pipeline_mode<synchronous>, transform_indices = @transform_5, window_bounds = array<i64: 1, 128>}, {pipeline_mode = #tpu.pipeline_mode<synchronous>, transform_indices = @transform_6, window_bounds = array<i64: 128, 128>}, {pipeline_mode = #tpu.pipeline_mode<synchronous>, transform_indices = @transform_7, window_bounds = array<i64: 1, 128>}, {transform_indices = @transform_8, window_bounds = array<i64: 16, 128>}, {transform_indices = @transform_9, window_bounds = array<i64: 16, 128>}]} {
    %c0_i32 = arith.constant 0 : i32
    %0 = arith.cmpi eq, %arg1, %c0_i32 : i32
    %1 = arith.extui %0 : i1 to i32
    %c0_i32_0 = arith.constant 0 : i32
    %2 = arith.cmpi ne, %1, %c0_i32_0 : i32
    scf.if %2 {
      %cst_11 = arith.constant 0.000000e+00 : f32
      %16 = vector.broadcast %cst_11 : f32 to vector<32x256xf32>
      %c0_12 = arith.constant 0 : index
      %c0_13 = arith.constant 0 : index
      %17 = vector.load %arg12[%c0_12, %c0_13] : memref<32x256xf32, #tpu.memory_space<vmem>>, vector<32x256xf32>
      tpu.vector_store %arg12[%c0_12, %c0_13], %16 {strides = array<i32>} : memref<32x256xf32, #tpu.memory_space<vmem>>, vector<32x256xf32>,
    } else {
    }
    %c0 = arith.constant 0 : index
    %c0_1 = arith.constant 0 : index
    %3 = vector.load %arg2[%c0, %c0_1] : memref<16x256xf32, #tpu.memory_space<vmem>>, vector<16x256xf32>
    %4 = arith.truncf %3 : vector<16x256xf32> to vector<16x256xbf16>
    %c0_2 = arith.constant 0 : index
    %c0_3 = arith.constant 0 : index
    %5 = vector.load %arg3[%c0_2, %c0_3] : memref<16x256xf32, #tpu.memory_space<vmem>>, vector<16x256xf32>
    %6 = arith.truncf %5 : vector<16x256xf32> to vector<16x256xbf16>
    %7 = tpu.concatenate %4, %6 in 0 : vector<16x256xbf16>, vector<16x256xbf16> -> vector<32x256xbf16>
    %c0_4 = arith.constant 0 : index
    %c0_5 = arith.constant 0 : index
    %8 = vector.load %arg12[%c0_4, %c0_5] : memref<32x256xf32, #tpu.memory_space<vmem>>, vector<32x256xf32>
    %c0_6 = arith.constant 0 : index
    %c0_7 = arith.constant 0 : index
    %9 = vector.load %arg4[%c0_6, %c0_7] : memref<256x256xbf16, #tpu.memory_space<vmem>>, vector<256x256xbf16>
    %cst = arith.constant dense<0.000000e+00> : vector<32x256xf32>
    %10 = tpu.matmul %7, %9, %cst {dimension_numbers = #tpu.dot_dimension_numbers<[1], [0], [0], [1], [0, 0, 1, 1], [], []>} : vector<32x256xbf16>, vector<256x256xbf16>, vector<32x256xf32> -> vector<32x256xf32>
    %11 = arith.addf %8, %10 : vector<32x256xf32>
    %c0_8 = arith.constant 0 : index
    %c0_9 = arith.constant 0 : index
    %12 = vector.load %arg12[%c0_8, %c0_9] : memref<32x256xf32, #tpu.memory_space<vmem>>, vector<32x256xf32>
    tpu.vector_store %arg12[%c0_8, %c0_9], %11 {strides = array<i32>} : memref<32x256xf32, #tpu.memory_space<vmem>>, vector<32x256xf32>,
    %c3_i32 = arith.constant 3 : i32
    %13 = arith.cmpi eq, %arg1, %c3_i32 : i32
    %14 = arith.extui %13 : i1 to i32
    %c0_i32_10 = arith.constant 0 : i32
    %15 = arith.cmpi ne, %14, %c0_i32_10 : i32
    scf.if %15 {
      %c0_11 = arith.constant 0 : index
      %c0_12 = arith.constant 0 : index
      %16 = vector.load %arg12[%c0_11, %c0_12] : memref<32x256xf32, #tpu.memory_space<vmem>>, vector<32x256xf32>
      %c0_13 = arith.constant 0 : index
      %c0_14 = arith.constant 0 : index
      %17 = vector.load %arg5[%c0_13, %c0_14] : memref<1x256xf32, #tpu.memory_space<vmem>>, vector<1x256xf32>
      %18 = vector.broadcast %17 : vector<1x256xf32> to vector<32x256xf32>
      %19 = arith.addf %16, %18 : vector<32x256xf32>
      %cst_15 = arith.constant 0.000000e+00 : f32
      %20 = vector.broadcast %cst_15 : f32 to vector<32x256xf32>
      %21 = arith.maximumf %19, %20 : vector<32x256xf32>
      %22 = arith.truncf %21 : vector<32x256xf32> to vector<32x256xbf16>
      %c0_16 = arith.constant 0 : index
      %c0_17 = arith.constant 0 : index
      %23 = vector.load %arg6[%c0_16, %c0_17] : memref<256x128xbf16, #tpu.memory_space<vmem>>, vector<256x128xbf16>
      %cst_18 = arith.constant dense<0.000000e+00> : vector<32x128xf32>
      %24 = tpu.matmul %22, %23, %cst_18 {dimension_numbers = #tpu.dot_dimension_numbers<[1], [0], [0], [1], [0, 0, 1, 1], [], []>} : vector<32x256xbf16>, vector<256x128xbf16>, vector<32x128xf32> -> vector<32x128xf32>
      %c0_19 = arith.constant 0 : index
      %c0_20 = arith.constant 0 : index
      %25 = vector.load %arg7[%c0_19, %c0_20] : memref<1x128xf32, #tpu.memory_space<vmem>>, vector<1x128xf32>
      %26 = vector.broadcast %25 : vector<1x128xf32> to vector<32x128xf32>
      %27 = arith.addf %24, %26 : vector<32x128xf32>
      %cst_21 = arith.constant 0.000000e+00 : f32
      %28 = vector.broadcast %cst_21 : f32 to vector<32x128xf32>
      %29 = arith.cmpf ogt, %27, %28 : vector<32x128xf32>
      %cst_22 = arith.constant 2.500000e-01 : f32
      %30 = vector.broadcast %cst_22 : f32 to vector<32x128xf32>
      %31 = arith.mulf %30, %27 : vector<32x128xf32>
      %32 = arith.select %29, %27, %31 : vector<32x128xi1>, vector<32x128xf32>
      %33 = arith.truncf %32 : vector<32x128xf32> to vector<32x128xbf16>
      %c0_23 = arith.constant 0 : index
      %c0_24 = arith.constant 0 : index
      %34 = vector.load %arg8[%c0_23, %c0_24] : memref<128x128xbf16, #tpu.memory_space<vmem>>, vector<128x128xbf16>
      %cst_25 = arith.constant dense<0.000000e+00> : vector<32x128xf32>
      %35 = tpu.matmul %33, %34, %cst_25 {dimension_numbers = #tpu.dot_dimension_numbers<[1], [0], [0], [1], [0, 0, 1, 1], [], []>} : vector<32x128xbf16>, vector<128x128xbf16>, vector<32x128xf32> -> vector<32x128xf32>
      %c0_26 = arith.constant 0 : index
      %c0_27 = arith.constant 0 : index
      %36 = vector.load %arg9[%c0_26, %c0_27] : memref<1x128xf32, #tpu.memory_space<vmem>>, vector<1x128xf32>
      %37 = vector.broadcast %36 : vector<1x128xf32> to vector<32x128xf32>
      %38 = arith.addf %35, %37 : vector<32x128xf32>
      %39 = vector.extract_strided_slice %38 {offsets = [0, 0], sizes = [16, 128], strides = [1, 1]} : vector<32x128xf32> to vector<16x128xf32>
      %c0_28 = arith.constant 0 : index
      %c0_29 = arith.constant 0 : index
      %40 = vector.load %arg10[%c0_28, %c0_29] : memref<16x128xf32, #tpu.memory_space<vmem>>, vector<16x128xf32>
      tpu.vector_store %arg10[%c0_28, %c0_29], %39 {strides = array<i32>} : memref<16x128xf32, #tpu.memory_space<vmem>>, vector<16x128xf32>,
      %41 = vector.extract_strided_slice %38 {offsets = [16, 0], sizes = [16, 128], strides = [1, 1]} : vector<32x128xf32> to vector<16x128xf32>
      %c0_30 = arith.constant 0 : index
      %c0_31 = arith.constant 0 : index
      %42 = vector.load %arg11[%c0_30, %c0_31] : memref<16x128xf32, #tpu.memory_space<vmem>>, vector<16x128xf32>
      tpu.vector_store %arg11[%c0_30, %c0_31], %41 {strides = array<i32>} : memref<16x128xf32, #tpu.memory_space<vmem>>, vector<16x128xf32>,
    } else {
    }
    return
  }
  func.func @transform_0(%arg0: i32, %arg1: i32) -> (i32, i32) {
    %c0_i32 = arith.constant 0 : i32
    return %arg0, %arg1 : i32, i32
  }
  func.func @transform_1(%arg0: i32, %arg1: i32) -> (i32, i32) {
    %c0_i32 = arith.constant 0 : i32
    return %arg0, %arg1 : i32, i32
  }
  func.func @transform_2(%arg0: i32, %arg1: i32) -> (i32, i32) {
    %c0_i32 = arith.constant 0 : i32
    %c0_i32_0 = arith.constant 0 : i32
    return %arg1, %c0_i32 : i32, i32
  }
  func.func @transform_3(%arg0: i32, %arg1: i32) -> (i32, i32) {
    %c0_i32 = arith.constant 0 : i32
    %c0_i32_0 = arith.constant 0 : i32
    %c0_i32_1 = arith.constant 0 : i32
    return %c0_i32, %c0_i32_0 : i32, i32
  }
  func.func @transform_4(%arg0: i32, %arg1: i32) -> (i32, i32) {
    %c0_i32 = arith.constant 0 : i32
    %c0_i32_0 = arith.constant 0 : i32
    %c0_i32_1 = arith.constant 0 : i32
    return %c0_i32, %c0_i32_0 : i32, i32
  }
  func.func @transform_5(%arg0: i32, %arg1: i32) -> (i32, i32) {
    %c0_i32 = arith.constant 0 : i32
    %c0_i32_0 = arith.constant 0 : i32
    %c0_i32_1 = arith.constant 0 : i32
    return %c0_i32, %c0_i32_0 : i32, i32
  }
  func.func @transform_6(%arg0: i32, %arg1: i32) -> (i32, i32) {
    %c0_i32 = arith.constant 0 : i32
    %c0_i32_0 = arith.constant 0 : i32
    %c0_i32_1 = arith.constant 0 : i32
    return %c0_i32, %c0_i32_0 : i32, i32
  }
  func.func @transform_7(%arg0: i32, %arg1: i32) -> (i32, i32) {
    %c0_i32 = arith.constant 0 : i32
    %c0_i32_0 = arith.constant 0 : i32
    %c0_i32_1 = arith.constant 0 : i32
    return %c0_i32, %c0_i32_0 : i32, i32
  }
  func.func @transform_8(%arg0: i32, %arg1: i32) -> (i32, i32) {
    %c0_i32 = arith.constant 0 : i32
    %c0_i32_0 = arith.constant 0 : i32
    return %arg0, %c0_i32 : i32, i32
  }
  func.func @transform_9(%arg0: i32, %arg1: i32) -> (i32, i32) {
    %c0_i32 = arith.constant 0 : i32
    %c0_i32_0 = arith.constant 0 : i32
    return %arg0, %c0_i32 : i32, i32
  }
}

</mosaic_0001>

<llo_original>
// kernel: tpu_custom_call.1
$region0: #{tpu_custom_call.1}
  #allocation0 [shape = 'u32[]', space=smem, size = 0x4, offset = 0x4, fixed_abs, tag = 'smem constant byte address 0x4 - core index']
  #allocation1 [shape = 'u32[72,128]{1,0:T(1,128)}', space=vmem, size = 0x9000, scoped, tag = 'internal scratch']
  #allocation2 [shape = 'f32[32,256]{1,0:T(8,128)}', space=vmem, size = 0x8000, scoped, tag = 'scratch operand']
  %s0 = inlined_call_operand.hbm [shape: f32[16,1024], index: 0, kind: input, shape index: {}]
  %s1 = inlined_call_operand.hbm [shape: f32[16,1024], index: 1, kind: input, shape index: {}]
  %s2 = inlined_call_operand.hbm [shape: bf16[1024,256], index: 2, kind: input, shape index: {}]
  %s3 = inlined_call_operand.vmem [shape: f32[1,256], index: 3, kind: input, shape index: {}]
  %s4 = inlined_call_operand.hbm [shape: bf16[256,128], index: 4, kind: input, shape index: {}]
  %s5 = inlined_call_operand.vmem [shape: f32[1,128], index: 5, kind: input, shape index: {}]
  %s6 = inlined_call_operand.hbm [shape: bf16[128,128], index: 6, kind: input, shape index: {}]
  %s7 = inlined_call_operand.vmem [shape: f32[1,128], index: 7, kind: input, shape index: {}]
  %s8 = inlined_call_operand.hbm [shape: f32[16,128], index: 8, kind: output, shape index: {0}]
  %s9 = inlined_call_operand.hbm [shape: f32[16,128], index: 9, kind: output, shape index: {1}]
  %10 = xla_tuple %s8, %s9
  %s11 = sld [smem:[#allocation0]]
  $region101: #{tpu_custom_call.1} parent=0
    _
  %s13 = ssub.s32 1, %s11
  %s14 = scalar_select 0, %s13, %s11
  $region1: #{tpu_custom_call.1} parent=0
    #allocation3 [shape = 'u8[32768]{0}', space=vmem, size = 0x8000, scoped, tag = 'input window, operand 0']
    #allocation4 [shape = 's32[2]{0}', space=sflag, size = 0x8, scoped, tag = 'scoped memory for tpu_custom_call.1']
    #allocation5 [shape = 's32[2]{0}', space=sflag, size = 0x8, scoped, tag = 'scoped memory for tpu_custom_call.1']
    #allocation6 [shape = 'u8[32768]{0}', space=vmem, size = 0x8000, scoped, tag = 'input window, operand 1']
    #allocation7 [shape = 's32[2]{0}', space=sflag, size = 0x8, scoped, tag = 'scoped memory for tpu_custom_call.1']
    #allocation8 [shape = 'u8[262144]{0}', space=vmem, size = 0x40000, scoped, tag = 'input window, operand 2']
    #allocation9 [shape = 'u8[65536]{0}', space=vmem, size = 0x10000, scoped, tag = 'input window, operand 4, single buffered']
    #allocation10 [shape = 's32[1]{0}', space=sflag, size = 0x4, scoped, tag = 'scoped memory for tpu_custom_call.1']
    #allocation11 [shape = 'u8[32768]{0}', space=vmem, size = 0x8000, scoped, tag = 'input window, operand 6, single buffered']
    #allocation12 [shape = 'u8[8192]{0}', space=vmem, size = 0x2000, scoped, tag = 'output window, operand 0, single buffered']
    #allocation13 [shape = 'u8[8192]{0}', space=vmem, size = 0x2000, scoped, tag = 'output window, operand 1, single buffered']
    #allocation14 [shape = 's32[1]{0}', space=sflag, size = 0x4, scoped, tag = 'scoped memory for tpu_custom_call.1']
    %15 = vsyncpa [#allocation4], 0
    %s16 = scalar_lea.sflag [#allocation4], 1
    %17 = vsyncpa %s16, 0
    %18 = vsyncpa [#allocation7], 0
    %s19 = scalar_lea.sflag [#allocation7], 1
    %20 = vsyncpa %s19, 0
    %21 = vsyncpa [#allocation10], 0
    %22 = vsyncpa [#allocation5], 0
    %23 = vsyncpa [#allocation14], 0
    loop: start=0, step=1, limit=6
    $region2: #{tpu_custom_call.1} parent=1 // loop_pre_header
      _
    $region3: #{tpu_custom_call.1} parent=1 // loop_header
      %s25 = sphi 0, %s29
      %p26 = scmp.ge.s32.totalorder %s25, 6
      %s32 = sphi 0, %s44
      %s33 = sphi 0, %s40
      %s34 = sphi 0, %s32
      %s35 = sphi 0, %s33
      %s36 = sphi 0, %s34
      %s37 = sphi 0, %s35
      %s49 = sphi 0, %s51
      %s52 = sphi 0, %s49
      %s53 = sphi 0, %s52
      %s69 = sphi 0, %s53
      %s77 = sphi 0, %s79
      %s80 = sphi 0, %s77
      %s81 = sphi 0, %s80
      %s97 = sphi 0, %s81
      %s103 = sphi 0, %s105
      %s106 = sphi 0, %s103
      %s107 = sphi 0, %s106
      %s123 = sphi 0, %s107
      %s127 = sphi 0, %s127
      %s129 = sphi 0, %s127
      %s130 = sphi 0, %s129
      %s144 = sphi 0, %s130
      %s148 = sphi 0, %s148
      %s150 = sphi 0, %s148
      %s151 = sphi 0, %s150
      %s165 = sphi 0, %s151
      %s169 = sphi 0, %s169
      %s171 = sphi 0, %s169
      %s172 = sphi 0, %s171
      %s186 = sphi 0, %s172
      %s190 = sphi 0, %s190
      %s192 = sphi 0, %s190
      %s193 = sphi 0, %s192
      %s207 = sphi 0, %s193
      %s211 = sphi 0, %s211
      %s213 = sphi 0, %s211
      %s214 = sphi 0, %s213
      %s228 = sphi 0, %s214
      %s234 = sphi 0, %s236
      %s237 = sphi 0, %s234
      %s238 = sphi 0, %s237
      %s254 = sphi 0, %s238
      %s260 = sphi 0, %s262
      %s263 = sphi 0, %s260
      %s264 = sphi 0, %s263
      %s280 = sphi 0, %s264
    $region4: #{tpu_custom_call.1} parent=1 // loop_header_branch
      %28 = sbr.rel (%p26) target = $region8
    $region5: #{tpu_custom_call.1} parent=1 // loop_body
      %s30 = ssub.s32 %s25, 1
      %s31 = ssub.s32 %s25, 2
      %s38 = sadd.s32 1, %s33
      %p39 = scmp.ge.s32.totalorder %s38, 4
      %s40 = scalar_select %p39, 0, %s38
      %s41 = sadd.s32 1, %s32
      %s42 = scalar_select %p39, %s41, %s32
      %p43 = scmp.ge.s32.totalorder %s42, 1
      %s44 = scalar_select %p43, 0, %s42
      %s45 = ssub.s32 %s32, %s44
      %s46 = ssub.s32 %s33, %s40
      %s47 = sor.u32 %s45, %s46
      %p48 = scmp.eq.s32.totalorder %s47, 0
      %s50 = sadd.s32 %s49, 1
      %s51 = scalar_select %p48, %s49, %s50
      %p54 = pneg %p48
      %p55 = scmp.eq.s32.totalorder %s25, 3
      %p56 = por %p54, %p55
      %p57 = scmp.ne.s32.totalorder %s49, %s52
      %p58 = scmp.eq.s32.totalorder %s25, 0
      %p59 = por %p57, %p58
      %p60 = scmp.ne.s32.totalorder %s49, %s52
      %p61 = scmp.eq.s32.totalorder %s30, 3
      %p62 = por %p60, %p61
      %p63 = scmp.ne.s32.totalorder %s52, %s53
      %p64 = scmp.eq.s32.totalorder %s30, 0
      %p65 = por %p63, %p64
      %p66 = scmp.ne.s32.totalorder %s52, %s53
      %p67 = scmp.eq.s32.totalorder %s31, 3
      %p68 = por %p66, %p67
      %p70 = scmp.ne.s32.totalorder %s53, %s69
      %p71 = scmp.eq.s32.totalorder %s31, 0
      %p72 = por %p70, %p71
      %s73 = ssub.s32 %s32, %s44
      %s74 = ssub.s32 %s33, %s40
      %s75 = sor.u32 %s73, %s74
      %p76 = scmp.eq.s32.totalorder %s75, 0
      %s78 = sadd.s32 %s77, 1
      %s79 = scalar_select %p76, %s77, %s78
      %p82 = pneg %p76
      %p83 = scmp.eq.s32.totalorder %s25, 3
      %p84 = por %p82, %p83
      %p85 = scmp.ne.s32.totalorder %s77, %s80
      %p86 = scmp.eq.s32.totalorder %s25, 0
      %p87 = por %p85, %p86
      %p88 = scmp.ne.s32.totalorder %s77, %s80
      %p89 = scmp.eq.s32.totalorder %s30, 3
      %p90 = por %p88, %p89
      %p91 = scmp.ne.s32.totalorder %s80, %s81
      %p92 = scmp.eq.s32.totalorder %s30, 0
      %p93 = por %p91, %p92
      %p94 = scmp.ne.s32.totalorder %s80, %s81
      %p95 = scmp.eq.s32.totalorder %s31, 3
      %p96 = por %p94, %p95
      %p98 = scmp.ne.s32.totalorder %s81, %s97
      %p99 = scmp.eq.s32.totalorder %s31, 0
      %p100 = por %p98, %p99
      %s101 = ssub.s32 %s33, %s40
      %p102 = scmp.eq.s32.totalorder %s101, 0
      %s104 = sadd.s32 %s103, 1
      %s105 = scalar_select %p102, %s103, %s104
      %p108 = pneg %p102
      %p109 = scmp.eq.s32.totalorder %s25, 3
      %p110 = por %p108, %p109
      %p111 = scmp.ne.s32.totalorder %s103, %s106
      %p112 = scmp.eq.s32.totalorder %s25, 0
      %p113 = por %p111, %p112
      %p114 = scmp.ne.s32.totalorder %s103, %s106
      %p115 = scmp.eq.s32.totalorder %s30, 3
      %p116 = por %p114, %p115
      %p117 = scmp.ne.s32.totalorder %s106, %s107
      %p118 = scmp.eq.s32.totalorder %s30, 0
      %p119 = por %p117, %p118
      %p120 = scmp.ne.s32.totalorder %s106, %s107
      %p121 = scmp.eq.s32.totalorder %s31, 3
      %p122 = por %p120, %p121
      %p124 = scmp.ne.s32.totalorder %s107, %s123
      %p125 = scmp.eq.s32.totalorder %s31, 0
      %p126 = por %p124, %p125
      %s128 = sadd.s32 %s127, 1
      %p131 = scmp.eq.s32.totalorder %s25, 3
      %p132 = scmp.ne.s32.totalorder %s127, %s129
      %p133 = scmp.eq.s32.totalorder %s25, 0
      %p134 = por %p132, %p133
      %p135 = scmp.ne.s32.totalorder %s127, %s129
      %p136 = scmp.eq.s32.totalorder %s30, 3
      %p137 = por %p135, %p136
      %p138 = scmp.ne.s32.totalorder %s129, %s130
      %p139 = scmp.eq.s32.totalorder %s30, 0
      %p140 = por %p138, %p139
      %p141 = scmp.ne.s32.totalorder %s129, %s130
      %p142 = scmp.eq.s32.totalorder %s31, 3
      %p143 = por %p141, %p142
      %p145 = scmp.ne.s32.totalorder %s130, %s144
      %p146 = scmp.eq.s32.totalorder %s31, 0
      %p147 = por %p145, %p146
      %s149 = sadd.s32 %s148, 1
      %p152 = scmp.eq.s32.totalorder %s25, 3
      %p153 = scmp.ne.s32.totalorder %s148, %s150
      %p154 = scmp.eq.s32.totalorder %s25, 0
      %p155 = por %p153, %p154
      %p156 = scmp.ne.s32.totalorder %s148, %s150
      %p157 = scmp.eq.s32.totalorder %s30, 3
      %p158 = por %p156, %p157
      %p159 = scmp.ne.s32.totalorder %s150, %s151
      %p160 = scmp.eq.s32.totalorder %s30, 0
      %p161 = por %p159, %p160
      %p162 = scmp.ne.s32.totalorder %s150, %s151
      %p163 = scmp.eq.s32.totalorder %s31, 3
      %p164 = por %p162, %p163
      %p166 = scmp.ne.s32.totalorder %s151, %s165
      %p167 = scmp.eq.s32.totalorder %s31, 0
      %p168 = por %p166, %p167
      %s170 = sadd.s32 %s169, 1
      %p173 = scmp.eq.s32.totalorder %s25, 3
      %p174 = scmp.ne.s32.totalorder %s169, %s171
      %p175 = scmp.eq.s32.totalorder %s25, 0
      %p176 = por %p174, %p175
      %p177 = scmp.ne.s32.totalorder %s169, %s171
      %p178 = scmp.eq.s32.totalorder %s30, 3
      %p179 = por %p177, %p178
      %p180 = scmp.ne.s32.totalorder %s171, %s172
      %p181 = scmp.eq.s32.totalorder %s30, 0
      %p182 = por %p180, %p181
      %p183 = scmp.ne.s32.totalorder %s171, %s172
      %p184 = scmp.eq.s32.totalorder %s31, 3
      %p185 = por %p183, %p184
      %p187 = scmp.ne.s32.totalorder %s172, %s186
      %p188 = scmp.eq.s32.totalorder %s31, 0
      %p189 = por %p187, %p188
      %s191 = sadd.s32 %s190, 1
      %p194 = scmp.eq.s32.totalorder %s25, 3
      %p195 = scmp.ne.s32.totalorder %s190, %s192
      %p196 = scmp.eq.s32.totalorder %s25, 0
      %p197 = por %p195, %p196
      %p198 = scmp.ne.s32.totalorder %s190, %s192
      %p199 = scmp.eq.s32.totalorder %s30, 3
      %p200 = por %p198, %p199
      %p201 = scmp.ne.s32.totalorder %s192, %s193
      %p202 = scmp.eq.s32.totalorder %s30, 0
      %p203 = por %p201, %p202
      %p204 = scmp.ne.s32.totalorder %s192, %s193
      %p205 = scmp.eq.s32.totalorder %s31, 3
      %p206 = por %p204, %p205
      %p208 = scmp.ne.s32.totalorder %s193, %s207
      %p209 = scmp.eq.s32.totalorder %s31, 0
      %p210 = por %p208, %p209
      %s212 = sadd.s32 %s211, 1
      %p215 = scmp.eq.s32.totalorder %s25, 3
      %p216 = scmp.ne.s32.totalorder %s211, %s213
      %p217 = scmp.eq.s32.totalorder %s25, 0
      %p218 = por %p216, %p217
      %p219 = scmp.ne.s32.totalorder %s211, %s213
      %p220 = scmp.eq.s32.totalorder %s30, 3
      %p221 = por %p219, %p220
      %p222 = scmp.ne.s32.totalorder %s213, %s214
      %p223 = scmp.eq.s32.totalorder %s30, 0
      %p224 = por %p222, %p223
      %p225 = scmp.ne.s32.totalorder %s213, %s214
      %p226 = scmp.eq.s32.totalorder %s31, 3
      %p227 = por %p225, %p226
      %p229 = scmp.ne.s32.totalorder %s214, %s228
      %p230 = scmp.eq.s32.totalorder %s31, 0
      %p231 = por %p229, %p230
      %s232 = ssub.s32 %s32, %s44
      %p233 = scmp.eq.s32.totalorder %s232, 0
      %s235 = sadd.s32 %s234, 1
      %s236 = scalar_select %p233, %s234, %s235
      %p239 = pneg %p233
      %p240 = scmp.eq.s32.totalorder %s25, 3
      %p241 = por %p239, %p240
      %p242 = scmp.ne.s32.totalorder %s234, %s237
      %p243 = scmp.eq.s32.totalorder %s25, 0
      %p244 = por %p242, %p243
      %p245 = scmp.ne.s32.totalorder %s234, %s237
      %p246 = scmp.eq.s32.totalorder %s30, 3
      %p247 = por %p245, %p246
      %p248 = scmp.ne.s32.totalorder %s237, %s238
      %p249 = scmp.eq.s32.totalorder %s30, 0
      %p250 = por %p248, %p249
      %p251 = scmp.ne.s32.totalorder %s237, %s238
      %p252 = scmp.eq.s32.totalorder %s31, 3
      %p253 = por %p251, %p252
      %p255 = scmp.ne.s32.totalorder %s238, %s254
      %p256 = scmp.eq.s32.totalorder %s31, 0
      %p257 = por %p255, %p256
      %s258 = ssub.s32 %s32, %s44
      %p259 = scmp.eq.s32.totalorder %s258, 0
      %s261 = sadd.s32 %s260, 1
      %s262 = scalar_select %p259, %s260, %s261
      %p265 = pneg %p259
      %p266 = scmp.eq.s32.totalorder %s25, 3
      %p267 = por %p265, %p266
      %p268 = scmp.ne.s32.totalorder %s260, %s263
      %p269 = scmp.eq.s32.totalorder %s25, 0
      %p270 = por %p268, %p269
      %p271 = scmp.ne.s32.totalorder %s260, %s263
      %p272 = scmp.eq.s32.totalorder %s30, 3
      %p273 = por %p271, %p272
      %p274 = scmp.ne.s32.totalorder %s263, %s264
      %p275 = scmp.eq.s32.totalorder %s30, 0
      %p276 = por %p274, %p275
      %p277 = scmp.ne.s32.totalorder %s263, %s264
      %p278 = scmp.eq.s32.totalorder %s31, 3
      %p279 = por %p277, %p278
      %p281 = scmp.ne.s32.totalorder %s264, %s280
      %p282 = scmp.eq.s32.totalorder %s31, 0
      %p283 = por %p281, %p282
      %p284 = scmp.le.s32.totalorder 1, %s25
      %p285 = scmp.lt.s32.totalorder %s25, 5
      %p286 = pnand %p284, %p285
      %p287 = pneg %p286
      // Predicated region
      $region9: #{tpu_custom_call.1} parent=5 // pred_check
        _
      $region10: #{tpu_custom_call.1} parent=5 // pred_check_branch
        %289 = sbr.rel (%p286) target = $region12
      $region11: #{tpu_custom_call.1} parent=5 // pred_region
        %s290 = ssub.s32 %s25, 1
        // Predicated region
        $region13: #{tpu_custom_call.1} parent=11 // pred_check
          %p291 = pneg %p140
        $region14: #{tpu_custom_call.1} parent=11 // pred_check_branch
          %293 = sbr.rel (%p291) target = $region16
        $region15: #{tpu_custom_call.1} parent=11 // pred_region
          _
        $region16: #{tpu_custom_call.1} parent=11 // pred_fallthru
          _
        // Predicated region
        $region17: #{tpu_custom_call.1} parent=11 // pred_check
          %p294 = pneg %p161
        $region18: #{tpu_custom_call.1} parent=11 // pred_check_branch
          %296 = sbr.rel (%p294) target = $region20
        $region19: #{tpu_custom_call.1} parent=11 // pred_region
          %298 = vsyncadd [#allocation10], 0
          %s299 = sshll.u32 %s4, 4
          %s300 = int_to_ptr.hbm [resolvable:$true] %s299
          %s301 = sshll.u32 [#allocation9], 4
          %s302 = int_to_ptr.vmem [resolvable:$true] %s301
          %307 = dma.hbm_to_vmem [thread:$0]  %s300, 2048, %s302, [#allocation10], 64, 64, 4
        $region20: #{tpu_custom_call.1} parent=11 // pred_fallthru
          _
        // Predicated region
        $region21: #{tpu_custom_call.1} parent=11 // pred_check
          %p308 = pneg %p182
        $region22: #{tpu_custom_call.1} parent=11 // pred_check_branch
          %310 = sbr.rel (%p308) target = $region24
        $region23: #{tpu_custom_call.1} parent=11 // pred_region
          _
        $region24: #{tpu_custom_call.1} parent=11 // pred_fallthru
          _
        // Predicated region
        $region25: #{tpu_custom_call.1} parent=11 // pred_check
          %p311 = pneg %p203
        $region26: #{tpu_custom_call.1} parent=11 // pred_check_branch
          %313 = sbr.rel (%p311) target = $region28
        $region27: #{tpu_custom_call.1} parent=11 // pred_region
          %315 = vsyncadd [#allocation10], 0
          %s316 = sshll.u32 %s6, 4
          %s317 = int_to_ptr.hbm [resolvable:$true] %s316
          %s318 = sshll.u32 [#allocation11], 4
          %s319 = int_to_ptr.vmem [resolvable:$true] %s318
          %324 = dma.hbm_to_vmem [thread:$0]  %s317, 1024, %s319, [#allocation10], 64, 64, 4
        $region28: #{tpu_custom_call.1} parent=11 // pred_fallthru
          _
        // Predicated region
        $region29: #{tpu_custom_call.1} parent=11 // pred_check
          %p325 = pneg %p224
        $region30: #{tpu_custom_call.1} parent=11 // pred_check_branch
          %327 = sbr.rel (%p325) target = $region32
        $region31: #{tpu_custom_call.1} parent=11 // pred_region
          _
        $region32: #{tpu_custom_call.1} parent=11 // pred_fallthru
          _
      $region12: #{tpu_custom_call.1} parent=5 // pred_fallthru
        _
      %p328 = scmp.lt.s32.totalorder %s25, 4
      // Predicated region
      $region33: #{tpu_custom_call.1} parent=5 // pred_check
        %p329 = pneg %p328
      $region34: #{tpu_custom_call.1} parent=5 // pred_check_branch
        %331 = sbr.rel (%p329) target = $region36
      $region35: #{tpu_custom_call.1} parent=5 // pred_region
        // Predicated region
        $region37: #{tpu_custom_call.1} parent=35 // pred_check
          %p332 = pneg %p59
        $region38: #{tpu_custom_call.1} parent=35 // pred_check_branch
          %334 = sbr.rel (%p332) target = $region40
        $region39: #{tpu_custom_call.1} parent=35 // pred_region
          %s335 = sand.u32 %s49, 1
          %s336 = scalar_lea.sflag [#allocation4], %s335
          %s337 = sand.u32 %s49, 1
          %s338 = smul.addr %s337, 32
          %s339 = scalar_lea.vmem [#allocation3], %s338
          %s340 = smul.u32 2, %s32
          %s341 = smul.u32 2, %s33
          %343 = vsyncadd %s336, 0
          %s344 = smul.addr %s340, 8
          %s345 = sadd.s32 %s341, %s344
          %s346 = smul.addr %s345, 8
          %s347 = scalar_lea.hbm %s0, %s346
          %s348 = sshll.u32 %s347, 4
          %s349 = int_to_ptr.hbm [resolvable:$true] %s348
          %s350 = sshll.u32 %s339, 4
          %s351 = int_to_ptr.vmem [resolvable:$true] %s350
          %356 = dma.hbm_to_vmem [thread:$0]  %s349, 512, %s351, %s336, 1024, 256, 16
        $region40: #{tpu_custom_call.1} parent=35 // pred_fallthru
          _
        // Predicated region
        $region41: #{tpu_custom_call.1} parent=35 // pred_check
          %p357 = pneg %p87
        $region42: #{tpu_custom_call.1} parent=35 // pred_check_branch
          %359 = sbr.rel (%p357) target = $region44
        $region43: #{tpu_custom_call.1} parent=35 // pred_region
          %s360 = sand.u32 %s25, 1
          %s361 = scalar_lea.sflag [#allocation7], %s360
          %s362 = sand.u32 %s77, 1
          %s363 = smul.addr %s362, 32
          %s364 = scalar_lea.vmem [#allocation6], %s363
          %s365 = smul.u32 2, %s32
          %s366 = smul.u32 2, %s33
          %368 = vsyncadd %s361, 0
          %s369 = smul.addr %s365, 8
          %s370 = sadd.s32 %s366, %s369
          %s371 = smul.addr %s370, 8
          %s372 = scalar_lea.hbm %s1, %s371
          %s373 = sshll.u32 %s372, 4
          %s374 = int_to_ptr.hbm [resolvable:$true] %s373
          %s375 = sshll.u32 %s364, 4
          %s376 = int_to_ptr.vmem [resolvable:$true] %s375
          %381 = dma.hbm_to_vmem [thread:$0]  %s374, 512, %s376, %s361, 1024, 256, 16
        $region44: #{tpu_custom_call.1} parent=35 // pred_fallthru
          _
        // Predicated region
        $region45: #{tpu_custom_call.1} parent=35 // pred_check
          %p382 = pneg %p113
        $region46: #{tpu_custom_call.1} parent=35 // pred_check_branch
          %384 = sbr.rel (%p382) target = $region48
        $region47: #{tpu_custom_call.1} parent=35 // pred_region
          %s385 = sand.u32 %s25, 1
          %s386 = scalar_lea.sflag [#allocation7], %s385
          %s387 = sand.u32 %s103, 1
          %s388 = smul.addr %s387, 256
          %s389 = scalar_lea.vmem [#allocation8], %s388
          %s390 = smul.u32 32, %s33
          %392 = vsyncadd %s386, 0
          %s393 = smul.addr %s390, 2
          %s394 = smul.addr %s393, 4
          %s395 = scalar_lea.hbm %s2, %s394
          %s396 = sshll.u32 %s395, 4
          %s397 = int_to_ptr.hbm [resolvable:$true] %s396
          %s398 = sshll.u32 %s389, 4
          %s399 = int_to_ptr.vmem [resolvable:$true] %s398
          %404 = dma.hbm_to_vmem [thread:$0]  %s397, 4096, %s399, %s386, 128, 128, 8
        $region48: #{tpu_custom_call.1} parent=35 // pred_fallthru
          _
      $region36: #{tpu_custom_call.1} parent=5 // pred_fallthru
        _
      %p405 = scmp.le.s32.totalorder 1, %s25
      %p406 = scmp.lt.s32.totalorder %s25, 5
      %p407 = pnand %p405, %p406
      %p408 = pneg %p407
      // Predicated region
      $region49: #{tpu_custom_call.1} parent=5 // pred_check
        _
      $region50: #{tpu_custom_call.1} parent=5 // pred_check_branch
        %410 = sbr.rel (%p407) target = $region52
      $region51: #{tpu_custom_call.1} parent=5 // pred_region
        %s411 = ssub.s32 %s25, 1
        %s412 = sand.u32 %s52, 1
        %s413 = scalar_lea.sflag [#allocation4], %s412
        %s414 = sand.u32 %s52, 1
        %s415 = smul.addr %s414, 32
        %s416 = scalar_lea.vmem [#allocation3], %s415
        // Predicated region
        $region53: #{tpu_custom_call.1} parent=51 // pred_check
          %p417 = pneg %p65
        $region54: #{tpu_custom_call.1} parent=51 // pred_check_branch
          %419 = sbr.rel (%p417) target = $region56
        $region55: #{tpu_custom_call.1} parent=51 // pred_region
          %421 = dma.done %s413, 512
        $region56: #{tpu_custom_call.1} parent=51 // pred_fallthru
          _
        %s422 = sand.u32 %s30, 1
        %s423 = scalar_lea.sflag [#allocation7], %s422
        %s424 = sand.u32 %s80, 1
        %s425 = smul.addr %s424, 32
        %s426 = scalar_lea.vmem [#allocation6], %s425
        // Predicated region
        $region57: #{tpu_custom_call.1} parent=51 // pred_check
          %p427 = pneg %p93
        $region58: #{tpu_custom_call.1} parent=51 // pred_check_branch
          %429 = sbr.rel (%p427) target = $region60
        $region59: #{tpu_custom_call.1} parent=51 // pred_region
          %431 = dma.done %s423, 512
        $region60: #{tpu_custom_call.1} parent=51 // pred_fallthru
          _
        %s432 = sand.u32 %s30, 1
        %s433 = scalar_lea.sflag [#allocation7], %s432
        %s434 = sand.u32 %s106, 1
        %s435 = smul.addr %s434, 256
        %s436 = scalar_lea.vmem [#allocation8], %s435
        // Predicated region
        $region61: #{tpu_custom_call.1} parent=51 // pred_check
          %p437 = pneg %p119
        $region62: #{tpu_custom_call.1} parent=51 // pred_check_branch
          %439 = sbr.rel (%p437) target = $region64
        $region63: #{tpu_custom_call.1} parent=51 // pred_region
          %441 = dma.done %s433, 4096
        $region64: #{tpu_custom_call.1} parent=51 // pred_fallthru
          _
        // Predicated region
        $region65: #{tpu_custom_call.1} parent=51 // pred_check
          %p442 = pneg %p161
        $region66: #{tpu_custom_call.1} parent=51 // pred_check_branch
          %444 = sbr.rel (%p442) target = $region68
        $region67: #{tpu_custom_call.1} parent=51 // pred_region
          %446 = dma.done [#allocation10], 2048
        $region68: #{tpu_custom_call.1} parent=51 // pred_fallthru
          _
        // Predicated region
        $region69: #{tpu_custom_call.1} parent=51 // pred_check
          %p447 = pneg %p203
        $region70: #{tpu_custom_call.1} parent=51 // pred_check_branch
          %449 = sbr.rel (%p447) target = $region72
        $region71: #{tpu_custom_call.1} parent=51 // pred_region
          %451 = dma.done [#allocation10], 1024
        $region72: #{tpu_custom_call.1} parent=51 // pred_fallthru
          _
        %s452 = sand.u32 %s52, 1
        %s453 = scalar_lea.sflag [#allocation4], %s452
        %s454 = sand.u32 %s52, 1
        %s455 = smul.addr %s454, 32
        %s456 = scalar_lea.vmem [#allocation3], %s455
        %p457 = pneg %p65
        %p458 = pneg %p62
        %s459 = sand.u32 %s30, 1
        %s460 = scalar_lea.sflag [#allocation7], %s459
        %s461 = sand.u32 %s80, 1
        %s462 = smul.addr %s461, 32
        %s463 = scalar_lea.vmem [#allocation6], %s462
        %p464 = pneg %p93
        %p465 = pneg %p90
        %s466 = sand.u32 %s30, 1
        %s467 = scalar_lea.sflag [#allocation7], %s466
        %s468 = sand.u32 %s106, 1
        %s469 = smul.addr %s468, 256
        %s470 = scalar_lea.vmem [#allocation8], %s469
        %p471 = pneg %p119
        %p472 = pneg %p116
        %p473 = pneg %p140
        %p474 = pneg %p137
        %p475 = pneg %p161
        %p476 = pneg %p158
        %p477 = pneg %p182
        %p478 = pneg %p179
        %p479 = pneg %p203
        %p480 = pneg %p200
        %p481 = pneg %p224
        %p482 = pneg %p221
        %p483 = pneg %p250
        %p484 = pneg %p247
        %p485 = pneg %p276
        %p486 = pneg %p273
        %s487 = smul.u32 2, %s34
        %s488 = smul.u32 2, %s35
        %s489 = smul.u32 2, %s34
        %s490 = smul.u32 2, %s35
        %s491 = smul.u32 32, %s35
        %s492 = smul.u32 2, %s34
        %s493 = smul.u32 2, %s34
        %p494 = scmp.eq.s32.totalorder %s35, 0
        // Predicated region
        $region73: #{tpu_custom_call.1} parent=51 // pred_check
          %p495 = pneg %p494
        $region74: #{tpu_custom_call.1} parent=51 // pred_check_branch
          %497 = sbr.rel (%p495) target = $region76
        $region75: #{tpu_custom_call.1} parent=51 // pred_region
          %498 = vst [vmem:[#allocation2] sm:$0xff] 0.0
          %499 = vst [vmem:[#allocation2 + $0x8] sm:$0xff] 0.0
          %500 = vst [vmem:[#allocation2 + $0x10] sm:$0xff] 0.0
          %501 = vst [vmem:[#allocation2 + $0x18] sm:$0xff] 0.0
          %502 = vst [vmem:[#allocation2 + $0x20] sm:$0xff] 0.0
          %503 = vst [vmem:[#allocation2 + $0x28] sm:$0xff] 0.0
          %504 = vst [vmem:[#allocation2 + $0x30] sm:$0xff] 0.0
          %505 = vst [vmem:[#allocation2 + $0x38] sm:$0xff] 0.0
        $region76: #{tpu_custom_call.1} parent=51 // pred_fallthru
          _
        %v506 = vld [vmem:[%s416] sm:$0xff]
        %v507 = vld [vmem:[%s416 + $0x8] sm:$0xff]
        %v508 = vld [vmem:[%s416 + $0x10] sm:$0xff]
        %v509 = vld [vmem:[%s416 + $0x18] sm:$0xff]
        %v510 = vpack.c.bf16 %v507, %v506
        %v511 = vpack.c.bf16 %v509, %v508
        %v512 = vld [vmem:[%s426] sm:$0xff]
        %v513 = vld [vmem:[%s426 + $0x8] sm:$0xff]
        %v514 = vld [vmem:[%s426 + $0x10] sm:$0xff]
        %v515 = vld [vmem:[%s426 + $0x18] sm:$0xff]
        %v516 = vpack.c.bf16 %v513, %v512
        %v517 = vpack.c.bf16 %v515, %v514
        %v520 = vunpack.c.l.b16 %v510
        %v521 = vunpack.c.h.b16 %v510
        %v522 = vunpack.c.l.b16 %v511
        %v523 = vunpack.c.h.b16 %v511
        %v524 = vpack.c.b16 %v522, %v520
        %v525 = vpack.c.b16 %v523, %v521
        %v530 = vunpack.c.l.b16 %v516
        %v531 = vunpack.c.h.b16 %v516
        %v532 = vunpack.c.l.b16 %v517
        %v533 = vunpack.c.h.b16 %v517
        %v534 = vpack.c.b16 %v532, %v530
        %v535 = vpack.c.b16 %v533, %v531
        %v538 = vld [vmem:[#allocation2] sm:$0xff]
        %v539 = vld [vmem:[#allocation2 + $0x8] sm:$0xff]
        %v540 = vld [vmem:[#allocation2 + $0x10] sm:$0xff]
        %v541 = vld [vmem:[#allocation2 + $0x18] sm:$0xff]
        %v542 = vld [vmem:[#allocation2 + $0x20] sm:$0xff]
        %v543 = vld [vmem:[#allocation2 + $0x28] sm:$0xff]
        %v544 = vld [vmem:[#allocation2 + $0x30] sm:$0xff]
        %v545 = vld [vmem:[#allocation2 + $0x38] sm:$0xff]
        %v546 = vld [vmem:[%s436] sm:$0xff]
        %v547 = vld [vmem:[%s436 + $0x8] sm:$0xff]
        %v548 = vld [vmem:[%s436 + $0x10] sm:$0xff]
        %v549 = vld [vmem:[%s436 + $0x18] sm:$0xff]
        %v550 = vld [vmem:[%s436 + $0x20] sm:$0xff]
        %v551 = vld [vmem:[%s436 + $0x28] sm:$0xff]
        %v552 = vld [vmem:[%s436 + $0x30] sm:$0xff]
        %v553 = vld [vmem:[%s436 + $0x38] sm:$0xff]
        %v554 = vld [vmem:[%s436 + $0x40] sm:$0xff]
        %v555 = vld [vmem:[%s436 + $0x48] sm:$0xff]
        %v556 = vld [vmem:[%s436 + $0x50] sm:$0xff]
        %v557 = vld [vmem:[%s436 + $0x58] sm:$0xff]
        %v558 = vld [vmem:[%s436 + $0x60] sm:$0xff]
        %v559 = vld [vmem:[%s436 + $0x68] sm:$0xff]
        %v560 = vld [vmem:[%s436 + $0x70] sm:$0xff]
        %v561 = vld [vmem:[%s436 + $0x78] sm:$0xff]
        %v562 = vld [vmem:[%s436 + $0x80] sm:$0xff]
        %v563 = vld [vmem:[%s436 + $0x88] sm:$0xff]
        %v564 = vld [vmem:[%s436 + $0x90] sm:$0xff]
        %v565 = vld [vmem:[%s436 + $0x98] sm:$0xff]
        %v566 = vld [vmem:[%s436 + $0xa0] sm:$0xff]
        %v567 = vld [vmem:[%s436 + $0xa8] sm:$0xff]
        %v568 = vld [vmem:[%s436 + $0xb0] sm:$0xff]
        %v569 = vld [vmem:[%s436 + $0xb8] sm:$0xff]
        %v570 = vld [vmem:[%s436 + $0xc0] sm:$0xff]
        %v571 = vld [vmem:[%s436 + $0xc8] sm:$0xff]
        %v572 = vld [vmem:[%s436 + $0xd0] sm:$0xff]
        %v573 = vld [vmem:[%s436 + $0xd8] sm:$0xff]
        %v574 = vld [vmem:[%s436 + $0xe0] sm:$0xff]
        %v575 = vld [vmem:[%s436 + $0xe8] sm:$0xff]
        %v576 = vld [vmem:[%s436 + $0xf0] sm:$0xff]
        %v577 = vld [vmem:[%s436 + $0xf8] sm:$0xff]
        %v610 = vunpack.c.l.b16 %v546
        %v611 = vunpack.c.h.b16 %v546
        %v612 = vunpack.c.l.b16 %v547
        %v613 = vunpack.c.h.b16 %v547
        %v614 = vunpack.c.l.b16 %v548
        %v615 = vunpack.c.h.b16 %v548
        %v616 = vunpack.c.l.b16 %v549
        %v617 = vunpack.c.h.b16 %v549
        %v618 = vunpack.c.l.b16 %v550
        %v619 = vunpack.c.h.b16 %v550
        %v620 = vunpack.c.l.b16 %v551
        %v621 = vunpack.c.h.b16 %v551
        %v622 = vunpack.c.l.b16 %v552
        %v623 = vunpack.c.h.b16 %v552
        %v624 = vunpack.c.l.b16 %v553
        %v625 = vunpack.c.h.b16 %v553
        %v626 = vunpack.c.l.b16 %v554
        %v627 = vunpack.c.h.b16 %v554
        %v628 = vunpack.c.l.b16 %v555
        %v629 = vunpack.c.h.b16 %v555
        %v630 = vunpack.c.l.b16 %v556
        %v631 = vunpack.c.h.b16 %v556
        %v632 = vunpack.c.l.b16 %v557
        %v633 = vunpack.c.h.b16 %v557
        %v634 = vunpack.c.l.b16 %v558
        %v635 = vunpack.c.h.b16 %v558
        %v636 = vunpack.c.l.b16 %v559
        %v637 = vunpack.c.h.b16 %v559
        %v638 = vunpack.c.l.b16 %v560
        %v639 = vunpack.c.h.b16 %v560
        %v640 = vunpack.c.l.b16 %v561
        %v641 = vunpack.c.h.b16 %v561
        %v642 = vunpack.c.l.b16 %v562
        %v643 = vunpack.c.h.b16 %v562
        %v644 = vunpack.c.l.b16 %v563
        %v645 = vunpack.c.h.b16 %v563
        %v646 = vunpack.c.l.b16 %v564
        %v647 = vunpack.c.h.b16 %v564
        %v648 = vunpack.c.l.b16 %v565
        %v649 = vunpack.c.h.b16 %v565
        %v650 = vunpack.c.l.b16 %v566
        %v651 = vunpack.c.h.b16 %v566
        %v652 = vunpack.c.l.b16 %v567
        %v653 = vunpack.c.h.b16 %v567
        %v654 = vunpack.c.l.b16 %v568
        %v655 = vunpack.c.h.b16 %v568
        %v656 = vunpack.c.l.b16 %v569
        %v657 = vunpack.c.h.b16 %v569
        %v658 = vunpack.c.l.b16 %v570
        %v659 = vunpack.c.h.b16 %v570
        %v660 = vunpack.c.l.b16 %v571
        %v661 = vunpack.c.h.b16 %v571
        %v662 = vunpack.c.l.b16 %v572
        %v663 = vunpack.c.h.b16 %v572
        %v664 = vunpack.c.l.b16 %v573
        %v665 = vunpack.c.h.b16 %v573
        %v666 = vunpack.c.l.b16 %v574
        %v667 = vunpack.c.h.b16 %v574
        %v668 = vunpack.c.l.b16 %v575
        %v669 = vunpack.c.h.b16 %v575
        %v670 = vunpack.c.l.b16 %v576
        %v671 = vunpack.c.h.b16 %v576
        %v672 = vunpack.c.l.b16 %v577
        %v673 = vunpack.c.h.b16 %v577
        %v674 = vpack.c.b16 %v612, %v610
        %v675 = vpack.c.b16 %v613, %v611
        %v676 = vpack.c.b16 %v616, %v614
        %v677 = vpack.c.b16 %v617, %v615
        %v678 = vpack.c.b16 %v620, %v618
        %v679 = vpack.c.b16 %v621, %v619
        %v680 = vpack.c.b16 %v624, %v622
        %v681 = vpack.c.b16 %v625, %v623
        %v682 = vpack.c.b16 %v628, %v626
        %v683 = vpack.c.b16 %v629, %v627
        %v684 = vpack.c.b16 %v632, %v630
        %v685 = vpack.c.b16 %v633, %v631
        %v686 = vpack.c.b16 %v636, %v634
        %v687 = vpack.c.b16 %v637, %v635
        %v688 = vpack.c.b16 %v640, %v638
        %v689 = vpack.c.b16 %v641, %v639
        %v690 = vpack.c.b16 %v644, %v642
        %v691 = vpack.c.b16 %v645, %v643
        %v692 = vpack.c.b16 %v648, %v646
        %v693 = vpack.c.b16 %v649, %v647
        %v694 = vpack.c.b16 %v652, %v650
        %v695 = vpack.c.b16 %v653, %v651
        %v696 = vpack.c.b16 %v656, %v654
        %v697 = vpack.c.b16 %v657, %v655
        %v698 = vpack.c.b16 %v660, %v658
        %v699 = vpack.c.b16 %v661, %v659
        %v700 = vpack.c.b16 %v664, %v662
        %v701 = vpack.c.b16 %v665, %v663
        %v702 = vpack.c.b16 %v668, %v666
        %v703 = vpack.c.b16 %v669, %v667
        %v704 = vpack.c.b16 %v672, %v670
        %v705 = vpack.c.b16 %v673, %v671
        %738 = vmatpush.bf16.msra.mxu0 %v688
        %739 = vmatpush.bf16.msra.mxu0 %v686
        %740 = vmatpush.bf16.msra.mxu0 %v684
        %741 = vmatpush.bf16.msra.mxu0 %v682
        %742 = vmatpush.bf16.msra.mxu0 %v680
        %743 = vmatpush.bf16.msra.mxu0 %v678
        %744 = vmatpush.bf16.msra.mxu0 %v676
        %745 = vmatpush.bf16.msra.mxu0 %v674
        %746 = vmatmul.bf16.gmra.mxu0 %v524
        %v747 = vpop.f32.mrf.mxu0
        %v748 = vadd.f32 0.0, %v747
        %v749 = vpop.f32.mrf.mxu0
        %v750 = vadd.f32 0.0, %v749
        %751 = vmatmul.bf16.gmra.mxu0 %v534
        %v752 = vpop.f32.mrf.mxu0
        %v753 = vadd.f32 0.0, %v752
        %v754 = vpop.f32.mrf.mxu0
        %v755 = vadd.f32 0.0, %v754
        %756 = vdwg.mxu0
        %757 = vmatpush.bf16.msra.mxu0 %v704
        %758 = vmatpush.bf16.msra.mxu0 %v702
        %759 = vmatpush.bf16.msra.mxu0 %v700
        %760 = vmatpush.bf16.msra.mxu0 %v698
        %761 = vmatpush.bf16.msra.mxu0 %v696
        %762 = vmatpush.bf16.msra.mxu0 %v694
        %763 = vmatpush.bf16.msra.mxu0 %v692
        %764 = vmatpush.bf16.msra.mxu0 %v690
        %765 = vmatmul.bf16.gmra.mxu0 %v525
        %v766 = vpop.f32.mrf.mxu0
        %v767 = vadd.f32 %v748, %v766
        %v768 = vpop.f32.mrf.mxu0
        %v769 = vadd.f32 %v750, %v768
        %770 = vmatmul.bf16.gmra.mxu0 %v535
        %v771 = vpop.f32.mrf.mxu0
        %v772 = vadd.f32 %v753, %v771
        %v773 = vpop.f32.mrf.mxu0
        %v774 = vadd.f32 %v755, %v773
        %775 = vdwg.mxu0
        %776 = vmatpush.bf16.msra.mxu0 %v689
        %777 = vmatpush.bf16.msra.mxu0 %v687
        %778 = vmatpush.bf16.msra.mxu0 %v685
        %779 = vmatpush.bf16.msra.mxu0 %v683
        %780 = vmatpush.bf16.msra.mxu0 %v681
        %781 = vmatpush.bf16.msra.mxu0 %v679
        %782 = vmatpush.bf16.msra.mxu0 %v677
        %783 = vmatpush.bf16.msra.mxu0 %v675
        %784 = vmatmul.bf16.gmra.mxu0 %v524
        %v785 = vpop.f32.mrf.mxu0
        %v786 = vadd.f32 0.0, %v785
        %v787 = vpop.f32.mrf.mxu0
        %v788 = vadd.f32 0.0, %v787
        %789 = vmatmul.bf16.gmra.mxu0 %v534
        %v790 = vpop.f32.mrf.mxu0
        %v791 = vadd.f32 0.0, %v790
        %v792 = vpop.f32.mrf.mxu0
        %v793 = vadd.f32 0.0, %v792
        %794 = vdwg.mxu0
        %795 = vmatpush.bf16.msra.mxu0 %v705
        %796 = vmatpush.bf16.msra.mxu0 %v703
        %797 = vmatpush.bf16.msra.mxu0 %v701
        %798 = vmatpush.bf16.msra.mxu0 %v699
        %799 = vmatpush.bf16.msra.mxu0 %v697
        %800 = vmatpush.bf16.msra.mxu0 %v695
        %801 = vmatpush.bf16.msra.mxu0 %v693
        %802 = vmatpush.bf16.msra.mxu0 %v691
        %803 = vmatmul.bf16.gmra.mxu0 %v525
        %v804 = vpop.f32.mrf.mxu0
        %v805 = vadd.f32 %v786, %v804
        %v806 = vpop.f32.mrf.mxu0
        %v807 = vadd.f32 %v788, %v806
        %808 = vmatmul.bf16.gmra.mxu0 %v535
        %v809 = vpop.f32.mrf.mxu0
        %v810 = vadd.f32 %v791, %v809
        %v811 = vpop.f32.mrf.mxu0
        %v812 = vadd.f32 %v793, %v811
        %813 = vdwg.mxu0
        %v814 = vadd.f32 %v538, %v767
        %v815 = vadd.f32 %v539, %v805
        %v816 = vadd.f32 %v540, %v769
        %v817 = vadd.f32 %v541, %v807
        %v818 = vadd.f32 %v542, %v772
        %v819 = vadd.f32 %v543, %v810
        %v820 = vadd.f32 %v544, %v774
        %v821 = vadd.f32 %v545, %v812
        %822 = vst [vmem:[#allocation2] sm:$0xff] %v814
        %823 = vst [vmem:[#allocation2 + $0x8] sm:$0xff] %v815
        %824 = vst [vmem:[#allocation2 + $0x10] sm:$0xff] %v816
        %825 = vst [vmem:[#allocation2 + $0x18] sm:$0xff] %v817
        %826 = vst [vmem:[#allocation2 + $0x20] sm:$0xff] %v818
        %827 = vst [vmem:[#allocation2 + $0x28] sm:$0xff] %v819
        %828 = vst [vmem:[#allocation2 + $0x30] sm:$0xff] %v820
        %829 = vst [vmem:[#allocation2 + $0x38] sm:$0xff] %v821
        %p830 = scmp.eq.s32.totalorder %s35, 3
        // Predicated region
        $region77: #{tpu_custom_call.1} parent=51 // pred_check
          %p831 = pneg %p830
        $region78: #{tpu_custom_call.1} parent=51 // pred_check_branch
          %833 = sbr.rel (%p831) target = $region80
        $region79: #{tpu_custom_call.1} parent=51 // pred_region
          %v834 = vld [vmem:[#allocation2] sm:$0xff]
          %v835 = vld [vmem:[#allocation2 + $0x8] sm:$0xff]
          %v836 = vld [vmem:[#allocation2 + $0x10] sm:$0xff]
          %v837 = vld [vmem:[#allocation2 + $0x18] sm:$0xff]
          %v838 = vld [vmem:[#allocation2 + $0x20] sm:$0xff]
          %v839 = vld [vmem:[#allocation2 + $0x28] sm:$0xff]
          %v840 = vld [vmem:[#allocation2 + $0x30] sm:$0xff]
          %v841 = vld [vmem:[#allocation2 + $0x38] sm:$0xff]
          %v842 = vld [vmem:[%s3] sm:$0x3]
          %v844 = vperm.slane %v842, 0
          %v845 = vperm.slane %v842, 1
          %v848 = vadd.f32 %v834, %v844
          %v849 = vadd.f32 %v835, %v845
          %v850 = vadd.f32 %v836, %v844
          %v851 = vadd.f32 %v837, %v845
          %v852 = vadd.f32 %v838, %v844
          %v853 = vadd.f32 %v839, %v845
          %v854 = vadd.f32 %v840, %v844
          %v855 = vadd.f32 %v841, %v845
          %v856 = vmax.f32 %v848, 0.0
          %v857 = vmax.f32 %v849, 0.0
          %v858 = vmax.f32 %v850, 0.0
          %v859 = vmax.f32 %v851, 0.0
          %v860 = vmax.f32 %v852, 0.0
          %v861 = vmax.f32 %v853, 0.0
          %v862 = vmax.f32 %v854, 0.0
          %v863 = vmax.f32 %v855, 0.0
          %v864 = vpack.c.bf16 %v858, %v856
          %v865 = vpack.c.bf16 %v859, %v857
          %v866 = vpack.c.bf16 %v862, %v860
          %v867 = vpack.c.bf16 %v863, %v861
          %v868 = vld [vmem:[#allocation9] sm:$0xf]
          %v869 = vld [vmem:[#allocation9 + $0x4] sm:$0xf]
          %v870 = vld [vmem:[#allocation9 + $0x8] sm:$0xf]
          %v871 = vld [vmem:[#allocation9 + $0xc] sm:$0xf]
          %v872 = vld [vmem:[#allocation9 + $0x10] sm:$0xf]
          %v873 = vld [vmem:[#allocation9 + $0x14] sm:$0xf]
          %v874 = vld [vmem:[#allocation9 + $0x18] sm:$0xf]
          %v875 = vld [vmem:[#allocation9 + $0x1c] sm:$0xf]
          %v876 = vld [vmem:[#allocation9 + $0x20] sm:$0xf]
          %v877 = vld [vmem:[#allocation9 + $0x24] sm:$0xf]
          %v878 = vld [vmem:[#allocation9 + $0x28] sm:$0xf]
          %v879 = vld [vmem:[#allocation9 + $0x2c] sm:$0xf]
          %v880 = vld [vmem:[#allocation9 + $0x30] sm:$0xf]
          %v881 = vld [vmem:[#allocation9 + $0x34] sm:$0xf]
          %v882 = vld [vmem:[#allocation9 + $0x38] sm:$0xf]
          %v883 = vld [vmem:[#allocation9 + $0x3c] sm:$0xf]
          %v884 = vld [vmem:[#allocation9 + $0x40] sm:$0xf]
          %v885 = vld [vmem:[#allocation9 + $0x44] sm:$0xf]
          %v886 = vld [vmem:[#allocation9 + $0x48] sm:$0xf]
          %v887 = vld [vmem:[#allocation9 + $0x4c] sm:$0xf]
          %v888 = vld [vmem:[#allocation9 + $0x50] sm:$0xf]
          %v889 = vld [vmem:[#allocation9 + $0x54] sm:$0xf]
          %v890 = vld [vmem:[#allocation9 + $0x58] sm:$0xf]
          %v891 = vld [vmem:[#allocation9 + $0x5c] sm:$0xf]
          %v892 = vld [vmem:[#allocation9 + $0x60] sm:$0xf]
          %v893 = vld [vmem:[#allocation9 + $0x64] sm:$0xf]
          %v894 = vld [vmem:[#allocation9 + $0x68] sm:$0xf]
          %v895 = vld [vmem:[#allocation9 + $0x6c] sm:$0xf]
          %v896 = vld [vmem:[#allocation9 + $0x70] sm:$0xf]
          %v897 = vld [vmem:[#allocation9 + $0x74] sm:$0xf]
          %v898 = vld [vmem:[#allocation9 + $0x78] sm:$0xf]
          %v899 = vld [vmem:[#allocation9 + $0x7c] sm:$0xf]
          %v900 = vld [vmem:[%s5] sm:$0x1]
          %v902 = vperm.slane %v900, 0
          %v936 = vunpack.c.l.b16 %v868
          %v937 = vunpack.c.l.b16 %v869
          %v938 = vunpack.c.l.b16 %v870
          %v939 = vunpack.c.l.b16 %v871
          %v940 = vunpack.c.l.b16 %v872
          %v941 = vunpack.c.l.b16 %v873
          %v942 = vunpack.c.l.b16 %v874
          %v943 = vunpack.c.l.b16 %v875
          %v944 = vunpack.c.l.b16 %v876
          %v945 = vunpack.c.l.b16 %v877
          %v946 = vunpack.c.l.b16 %v878
          %v947 = vunpack.c.l.b16 %v879
          %v948 = vunpack.c.l.b16 %v880
          %v949 = vunpack.c.l.b16 %v881
          %v950 = vunpack.c.l.b16 %v882
          %v951 = vunpack.c.l.b16 %v883
          %v952 = vunpack.c.l.b16 %v884
          %v953 = vunpack.c.l.b16 %v885
          %v954 = vunpack.c.l.b16 %v886
          %v955 = vunpack.c.l.b16 %v887
          %v956 = vunpack.c.l.b16 %v888
          %v957 = vunpack.c.l.b16 %v889
          %v958 = vunpack.c.l.b16 %v890
          %v959 = vunpack.c.l.b16 %v891
          %v960 = vunpack.c.l.b16 %v892
          %v961 = vunpack.c.l.b16 %v893
          %v962 = vunpack.c.l.b16 %v894
          %v963 = vunpack.c.l.b16 %v895
          %v964 = vunpack.c.l.b16 %v896
          %v965 = vunpack.c.l.b16 %v897
          %v966 = vunpack.c.l.b16 %v898
          %v967 = vunpack.c.l.b16 %v899
          %v968 = vpack.c.b16 %v937, %v936
          %v969 = vpack.c.b16 %v939, %v938
          %v970 = vpack.c.b16 %v941, %v940
          %v971 = vpack.c.b16 %v943, %v942
          %v972 = vpack.c.b16 %v945, %v944
          %v973 = vpack.c.b16 %v947, %v946
          %v974 = vpack.c.b16 %v949, %v948
          %v975 = vpack.c.b16 %v951, %v950
          %v976 = vpack.c.b16 %v953, %v952
          %v977 = vpack.c.b16 %v955, %v954
          %v978 = vpack.c.b16 %v957, %v956
          %v979 = vpack.c.b16 %v959, %v958
          %v980 = vpack.c.b16 %v961, %v960
          %v981 = vpack.c.b16 %v963, %v962
          %v982 = vpack.c.b16 %v965, %v964
          %v983 = vpack.c.b16 %v967, %v966
          %1000 = vmatpush.bf16.msra.mxu0 %v975
          %1001 = vmatpush.bf16.msra.mxu0 %v974
          %1002 = vmatpush.bf16.msra.mxu0 %v973
          %1003 = vmatpush.bf16.msra.mxu0 %v972
          %1004 = vmatpush.bf16.msra.mxu0 %v971
          %1005 = vmatpush.bf16.msra.mxu0 %v970
          %1006 = vmatpush.bf16.msra.mxu0 %v969
          %1007 = vmatpush.bf16.msra.mxu0 %v968
          %1008 = vmatmul.bf16.gmra.mxu0 %v864
          %v1009 = vpop.f32.mrf.mxu0
          %v1010 = vadd.f32 %v902, %v1009
          %v1011 = vpop.f32.mrf.mxu0
          %v1012 = vadd.f32 %v902, %v1011
          %1013 = vmatmul.bf16.gmra.mxu0 %v866
          %v1014 = vpop.f32.mrf.mxu0
          %v1015 = vadd.f32 %v902, %v1014
          %v1016 = vpop.f32.mrf.mxu0
          %v1017 = vadd.f32 %v902, %v1016
          %1018 = vdwg.mxu0
          %1019 = vmatpush.bf16.msra.mxu0 %v983
          %1020 = vmatpush.bf16.msra.mxu0 %v982
          %1021 = vmatpush.bf16.msra.mxu0 %v981
          %1022 = vmatpush.bf16.msra.mxu0 %v980
          %1023 = vmatpush.bf16.msra.mxu0 %v979
          %1024 = vmatpush.bf16.msra.mxu0 %v978
          %1025 = vmatpush.bf16.msra.mxu0 %v977
          %1026 = vmatpush.bf16.msra.mxu0 %v976
          %1027 = vmatmul.bf16.gmra.mxu0 %v865
          %v1028 = vpop.f32.mrf.mxu0
          %v1029 = vadd.f32 %v1010, %v1028
          %v1030 = vpop.f32.mrf.mxu0
          %v1031 = vadd.f32 %v1012, %v1030
          %1032 = vmatmul.bf16.gmra.mxu0 %v867
          %v1033 = vpop.f32.mrf.mxu0
          %v1034 = vadd.f32 %v1015, %v1033
          %v1035 = vpop.f32.mrf.mxu0
          %v1036 = vadd.f32 %v1017, %v1035
          %1037 = vdwg.mxu0
          %vm1038 = vcmp.gt.f32.partialorder %v1029, 0.0
          %vm1039 = vcmp.gt.f32.partialorder %v1031, 0.0
          %vm1040 = vcmp.gt.f32.partialorder %v1034, 0.0
          %vm1041 = vcmp.gt.f32.partialorder %v1036, 0.0
          %v1042 = vmul.f32 %v1029, 0.25
          %v1043 = vmul.f32 %v1031, 0.25
          %v1044 = vmul.f32 %v1034, 0.25
          %v1045 = vmul.f32 %v1036, 0.25
          %v1046 = vsel %vm1038, %v1029, %v1042
          %v1047 = vsel %vm1039, %v1031, %v1043
          %v1048 = vsel %vm1040, %v1034, %v1044
          %v1049 = vsel %vm1041, %v1036, %v1045
          %v1050 = vpack.c.bf16 %v1047, %v1046
          %v1051 = vpack.c.bf16 %v1049, %v1048
          %v1052 = vld [vmem:[#allocation11] sm:$0xf]
          %v1053 = vld [vmem:[#allocation11 + $0x4] sm:$0xf]
          %v1054 = vld [vmem:[#allocation11 + $0x8] sm:$0xf]
          %v1055 = vld [vmem:[#allocation11 + $0xc] sm:$0xf]
          %v1056 = vld [vmem:[#allocation11 + $0x10] sm:$0xf]
          %v1057 = vld [vmem:[#allocation11 + $0x14] sm:$0xf]
          %v1058 = vld [vmem:[#allocation11 + $0x18] sm:$0xf]
          %v1059 = vld [vmem:[#allocation11 + $0x1c] sm:$0xf]
          %v1060 = vld [vmem:[#allocation11 + $0x20] sm:$0xf]
          %v1061 = vld [vmem:[#allocation11 + $0x24] sm:$0xf]
          %v1062 = vld [vmem:[#allocation11 + $0x28] sm:$0xf]
          %v1063 = vld [vmem:[#allocation11 + $0x2c] sm:$0xf]
          %v1064 = vld [vmem:[#allocation11 + $0x30] sm:$0xf]
          %v1065 = vld [vmem:[#allocation11 + $0x34] sm:$0xf]
          %v1066 = vld [vmem:[#allocation11 + $0x38] sm:$0xf]
          %v1067 = vld [vmem:[#allocation11 + $0x3c] sm:$0xf]
          %v1068 = vld [vmem:[%s7] sm:$0x1]
          %v1070 = vperm.slane %v1068, 0
          %v1088 = vunpack.c.l.b16 %v1052
          %v1089 = vunpack.c.l.b16 %v1053
          %v1090 = vunpack.c.l.b16 %v1054
          %v1091 = vunpack.c.l.b16 %v1055
          %v1092 = vunpack.c.l.b16 %v1056
          %v1093 = vunpack.c.l.b16 %v1057
          %v1094 = vunpack.c.l.b16 %v1058
          %v1095 = vunpack.c.l.b16 %v1059
          %v1096 = vunpack.c.l.b16 %v1060
          %v1097 = vunpack.c.l.b16 %v1061
          %v1098 = vunpack.c.l.b16 %v1062
          %v1099 = vunpack.c.l.b16 %v1063
          %v1100 = vunpack.c.l.b16 %v1064
          %v1101 = vunpack.c.l.b16 %v1065
          %v1102 = vunpack.c.l.b16 %v1066
          %v1103 = vunpack.c.l.b16 %v1067
          %v1104 = vpack.c.b16 %v1089, %v1088
          %v1105 = vpack.c.b16 %v1091, %v1090
          %v1106 = vpack.c.b16 %v1093, %v1092
          %v1107 = vpack.c.b16 %v1095, %v1094
          %v1108 = vpack.c.b16 %v1097, %v1096
          %v1109 = vpack.c.b16 %v1099, %v1098
          %v1110 = vpack.c.b16 %v1101, %v1100
          %v1111 = vpack.c.b16 %v1103, %v1102
          %1120 = vmatpush.bf16.msra.mxu0 %v1111
          %1121 = vmatpush.bf16.msra.mxu0 %v1110
          %1122 = vmatpush.bf16.msra.mxu0 %v1109
          %1123 = vmatpush.bf16.msra.mxu0 %v1108
          %1124 = vmatpush.bf16.msra.mxu0 %v1107
          %1125 = vmatpush.bf16.msra.mxu0 %v1106
          %1126 = vmatpush.bf16.msra.mxu0 %v1105
          %1127 = vmatpush.bf16.msra.mxu0 %v1104
          %1128 = vmatmul.bf16.gmra.mxu0 %v1050
          %v1129 = vpop.f32.mrf.mxu0
          %v1130 = vadd.f32 %v1070, %v1129
          %v1131 = vpop.f32.mrf.mxu0
          %v1132 = vadd.f32 %v1070, %v1131
          %1133 = vmatmul.bf16.gmra.mxu0 %v1051
          %v1134 = vpop.f32.mrf.mxu0
          %v1135 = vadd.f32 %v1070, %v1134
          %v1136 = vpop.f32.mrf.mxu0
          %v1137 = vadd.f32 %v1070, %v1136
          %1138 = vdwg.mxu0
          %1139 = vst [vmem:[#allocation12] sm:$0xff] %v1130
          %1140 = vst [vmem:[#allocation12 + $0x8] sm:$0xff] %v1132
          %1141 = vst [vmem:[#allocation13] sm:$0xff] %v1135
          %1142 = vst [vmem:[#allocation13 + $0x8] sm:$0xff] %v1137
        $region80: #{tpu_custom_call.1} parent=51 // pred_fallthru
          _
        // Predicated region
        $region81: #{tpu_custom_call.1} parent=51 // pred_check
          %p1143 = pneg %p247
        $region82: #{tpu_custom_call.1} parent=51 // pred_check_branch
          %1145 = sbr.rel (%p1143) target = $region84
        $region83: #{tpu_custom_call.1} parent=51 // pred_region
          %s1146 = smul.u32 2, %s34
          %1148 = vsyncadd [#allocation5], 0
          %s1149 = smul.addr %s1146, 8
          %s1150 = scalar_lea.hbm %s8, %s1149
          %s1151 = sshll.u32 [#allocation12], 4
          %s1152 = int_to_ptr.vmem [resolvable:$true] %s1151
          %s1153 = sshll.u32 %s1150, 4
          %s1154 = int_to_ptr.hbm [resolvable:$true] %s1153
          %1159 = dma.vmem_to_hbm [thread:$0]  %s1152, 256, %s1154, [#allocation5], 128, 128, 8
        $region84: #{tpu_custom_call.1} parent=51 // pred_fallthru
          _
        // Predicated region
        $region85: #{tpu_custom_call.1} parent=51 // pred_check
          %p1160 = pneg %p273
        $region86: #{tpu_custom_call.1} parent=51 // pred_check_branch
          %1162 = sbr.rel (%p1160) target = $region88
        $region87: #{tpu_custom_call.1} parent=51 // pred_region
          %s1163 = smul.u32 2, %s34
          %1165 = vsyncadd [#allocation14], 0
          %s1166 = smul.addr %s1163, 8
          %s1167 = scalar_lea.hbm %s9, %s1166
          %s1168 = sshll.u32 [#allocation13], 4
          %s1169 = int_to_ptr.vmem [resolvable:$true] %s1168
          %s1170 = sshll.u32 %s1167, 4
          %s1171 = int_to_ptr.hbm [resolvable:$true] %s1170
          %1176 = dma.vmem_to_hbm [thread:$0]  %s1169, 256, %s1171, [#allocation14], 128, 128, 8
        $region88: #{tpu_custom_call.1} parent=51 // pred_fallthru
          _
        // Predicated region
        $region89: #{tpu_custom_call.1} parent=51 // pred_check
          %p1177 = pneg %p247
        $region90: #{tpu_custom_call.1} parent=51 // pred_check_branch
          %1179 = sbr.rel (%p1177) target = $region92
        $region91: #{tpu_custom_call.1} parent=51 // pred_region
          %1181 = dma.done [#allocation5], 256
        $region92: #{tpu_custom_call.1} parent=51 // pred_fallthru
          _
        // Predicated region
        $region93: #{tpu_custom_call.1} parent=51 // pred_check
          %p1182 = pneg %p273
        $region94: #{tpu_custom_call.1} parent=51 // pred_check_branch
          %1184 = sbr.rel (%p1182) target = $region96
        $region95: #{tpu_custom_call.1} parent=51 // pred_region
          %1186 = dma.done [#allocation14], 256
        $region96: #{tpu_custom_call.1} parent=51 // pred_fallthru
          _
      $region52: #{tpu_custom_call.1} parent=5 // pred_fallthru
        _
      %p1187 = scmp.le.s32.totalorder 2, %s25
      // Predicated region
      $region97: #{tpu_custom_call.1} parent=5 // pred_check
        %p1188 = pneg %p1187
      $region98: #{tpu_custom_call.1} parent=5 // pred_check_branch
        %1190 = sbr.rel (%p1188) target = $region100
      $region99: #{tpu_custom_call.1} parent=5 // pred_region
        %s1191 = ssub.s32 %s25, 2
      $region100: #{tpu_custom_call.1} parent=5 // pred_fallthru
        _
    $region6: #{tpu_custom_call.1} parent=1 // loop_footer
      %s29 = sadd.s32 1, %s25
    $region7: #{tpu_custom_call.1} parent=1 // loop_footer_branch
      %24 = sbr.rel target = $region3
    $region8: #{tpu_custom_call.1} parent=1 // loop_exit
      _
    %1192 = vsyncpa [#allocation4], 1
    %s1193 = scalar_lea.sflag [#allocation4], 1
    %1194 = vsyncpa %s1193, 1
    %1195 = vsyncpa [#allocation7], 1
    %s1196 = scalar_lea.sflag [#allocation7], 1
    %1197 = vsyncpa %s1196, 1
    %1198 = vsyncpa [#allocation10], 1
    %1199 = vsyncpa [#allocation5], 1
    %s1200 = scalar_lea.sflag [#allocation5], 1
    %1201 = vsyncpa %s1200, 1
    %1202 = vsyncpa [#allocation14], 1

// kernel: tpu_custom_call.1
$region0: #{tpu_custom_call.1}
  #allocation0 [shape = 'u32[]', space=smem, size = 0x4, offset = 0x4, fixed_abs, tag = 'smem constant byte address 0x4 - core index']
  #allocation1 [shape = 'u32[72,128]{1,0:T(1,128)}', space=vmem, size = 0x9000, scoped, tag = 'internal scratch']
  #allocation2 [shape = 'f32[32,256]{1,0:T(8,128)}', space=vmem, size = 0x8000, scoped, tag = 'scratch operand']
  %s0 = inlined_call_operand.hbm [shape: f32[16,1024], index: 0, kind: input, shape index: {}]
  %s1 = inlined_call_operand.hbm [shape: f32[16,1024], index: 1, kind: input, shape index: {}]
  %s2 = inlined_call_operand.hbm [shape: bf16[1024,256], index: 2, kind: input, shape index: {}]
  %s3 = inlined_call_operand.vmem [shape: f32[1,256], index: 3, kind: input, shape index: {}]
  %s4 = inlined_call_operand.hbm [shape: bf16[256,128], index: 4, kind: input, shape index: {}]
  %s5 = inlined_call_operand.vmem [shape: f32[1,128], index: 5, kind: input, shape index: {}]
  %s6 = inlined_call_operand.hbm [shape: bf16[128,128], index: 6, kind: input, shape index: {}]
  %s7 = inlined_call_operand.vmem [shape: f32[1,128], index: 7, kind: input, shape index: {}]
  %s8 = inlined_call_operand.hbm [shape: f32[16,128], index: 8, kind: output, shape index: {0}]
  %s9 = inlined_call_operand.hbm [shape: f32[16,128], index: 9, kind: output, shape index: {1}]
  %10 = xla_tuple %s8, %s9
  %s11 = sld [smem:[#allocation0]]
  $region101: #{tpu_custom_call.1} parent=0
    _
  %s13 = ssub.s32 1, %s11
  %s14 = scalar_select 0, %s13, %s11
  $region1: #{tpu_custom_call.1} parent=0
    #allocation3 [shape = 'u8[32768]{0}', space=vmem, size = 0x8000, scoped, tag = 'input window, operand 0']
    #allocation4 [shape = 's32[2]{0}', space=sflag, size = 0x8, scoped, tag = 'scoped memory for tpu_custom_call.1']
    #allocation5 [shape = 's32[2]{0}', space=sflag, size = 0x8, scoped, tag = 'scoped memory for tpu_custom_call.1']
    #allocation6 [shape = 'u8[32768]{0}', space=vmem, size = 0x8000, scoped, tag = 'input window, operand 1']
    #allocation7 [shape = 's32[2]{0}', space=sflag, size = 0x8, scoped, tag = 'scoped memory for tpu_custom_call.1']
    #allocation8 [shape = 'u8[262144]{0}', space=vmem, size = 0x40000, scoped, tag = 'input window, operand 2']
    #allocation9 [shape = 'u8[65536]{0}', space=vmem, size = 0x10000, scoped, tag = 'input window, operand 4, single buffered']
    #allocation10 [shape = 's32[1]{0}', space=sflag, size = 0x4, scoped, tag = 'scoped memory for tpu_custom_call.1']
    #allocation11 [shape = 'u8[32768]{0}', space=vmem, size = 0x8000, scoped, tag = 'input window, operand 6, single buffered']
    #allocation12 [shape = 'u8[8192]{0}', space=vmem, size = 0x2000, scoped, tag = 'output window, operand 0, single buffered']
    #allocation13 [shape = 'u8[8192]{0}', space=vmem, size = 0x2000, scoped, tag = 'output window, operand 1, single buffered']
    #allocation14 [shape = 's32[1]{0}', space=sflag, size = 0x4, scoped, tag = 'scoped memory for tpu_custom_call.1']
    %15 = vsyncpa [#allocation4], 0
    %s16 = scalar_lea.sflag [#allocation4], 1
    %17 = vsyncpa %s16, 0
    %18 = vsyncpa [#allocation7], 0
    %s19 = scalar_lea.sflag [#allocation7], 1
    %20 = vsyncpa %s19, 0
    %21 = vsyncpa [#allocation10], 0
    %22 = vsyncpa [#allocation5], 0
    %23 = vsyncpa [#allocation14], 0
    loop: start=0, step=1, limit=6
    $region2: #{tpu_custom_call.1} parent=1 // loop_pre_header
      _
    $region3: #{tpu_custom_call.1} parent=1 // loop_header
      %s25 = sphi 0, %s29
      %p26 = scmp.ge.s32.totalorder %s25, 6
      %s32 = sphi 0, %s44
      %s33 = sphi 0, %s40
      %s34 = sphi 0, %s32
      %s35 = sphi 0, %s33
      %s36 = sphi 0, %s34
      %s37 = sphi 0, %s35
      %s49 = sphi 0, %s51
      %s52 = sphi 0, %s49
      %s53 = sphi 0, %s52
      %s69 = sphi 0, %s53
      %s77 = sphi 0, %s79
      %s80 = sphi 0, %s77
      %s81 = sphi 0, %s80
      %s97 = sphi 0, %s81
      %s103 = sphi 0, %s105
      %s106 = sphi 0, %s103
      %s107 = sphi 0, %s106
      %s123 = sphi 0, %s107
      %s127 = sphi 0, %s127
      %s129 = sphi 0, %s127
      %s130 = sphi 0, %s129
      %s144 = sphi 0, %s130
      %s148 = sphi 0, %s148
      %s150 = sphi 0, %s148
      %s151 = sphi 0, %s150
      %s165 = sphi 0, %s151
      %s169 = sphi 0, %s169
      %s171 = sphi 0, %s169
      %s172 = sphi 0, %s171
      %s186 = sphi 0, %s172
      %s190 = sphi 0, %s190
      %s192 = sphi 0, %s190
      %s193 = sphi 0, %s192
      %s207 = sphi 0, %s193
      %s211 = sphi 0, %s211
      %s213 = sphi 0, %s211
      %s214 = sphi 0, %s213
      %s228 = sphi 0, %s214
      %s234 = sphi 0, %s236
      %s237 = sphi 0, %s234
      %s238 = sphi 0, %s237
      %s254 = sphi 0, %s238
      %s260 = sphi 0, %s262
      %s263 = sphi 0, %s260
      %s264 = sphi 0, %s263
      %s280 = sphi 0, %s264
    $region4: #{tpu_custom_call.1} parent=1 // loop_header_branch
      %28 = sbr.rel (%p26) target = $region8
    $region5: #{tpu_custom_call.1} parent=1 // loop_body
      %s30 = ssub.s32 %s25, 1
      %s31 = ssub.s32 %s25, 2
      %s38 = sadd.s32 1, %s33
      %p39 = scmp.ge.s32.totalorder %s38, 4
      %s40 = scalar_select %p39, 0, %s38
      %s41 = sadd.s32 1, %s32
      %s42 = scalar_select %p39, %s41, %s32
      %p43 = scmp.ge.s32.totalorder %s42, 1
      %s44 = scalar_select %p43, 0, %s42
      %s45 = ssub.s32 %s32, %s44
      %s46 = ssub.s32 %s33, %s40
      %s47 = sor.u32 %s45, %s46
      %p48 = scmp.eq.s32.totalorder %s47, 0
      %s50 = sadd.s32 %s49, 1
      %s51 = scalar_select %p48, %s49, %s50
      %p54 = pneg %p48
      %p55 = scmp.eq.s32.totalorder %s25, 3
      %p56 = por %p54, %p55
      %p57 = scmp.ne.s32.totalorder %s49, %s52
      %p58 = scmp.eq.s32.totalorder %s25, 0
      %p59 = por %p57, %p58
      %p60 = scmp.ne.s32.totalorder %s49, %s52
      %p61 = scmp.eq.s32.totalorder %s30, 3
      %p62 = por %p60, %p61
      %p63 = scmp.ne.s32.totalorder %s52, %s53
      %p64 = scmp.eq.s32.totalorder %s30, 0
      %p65 = por %p63, %p64
      %p66 = scmp.ne.s32.totalorder %s52, %s53
      %p67 = scmp.eq.s32.totalorder %s31, 3
      %p68 = por %p66, %p67
      %p70 = scmp.ne.s32.totalorder %s53, %s69
      %p71 = scmp.eq.s32.totalorder %s31, 0
      %p72 = por %p70, %p71
      %s73 = ssub.s32 %s32, %s44
      %s74 = ssub.s32 %s33, %s40
      %s75 = sor.u32 %s73, %s74
      %p76 = scmp.eq.s32.totalorder %s75, 0
      %s78 = sadd.s32 %s77, 1
      %s79 = scalar_select %p76, %s77, %s78
      %p82 = pneg %p76
      %p83 = scmp.eq.s32.totalorder %s25, 3
      %p84 = por %p82, %p83
      %p85 = scmp.ne.s32.totalorder %s77, %s80
      %p86 = scmp.eq.s32.totalorder %s25, 0
      %p87 = por %p85, %p86
      %p88 = scmp.ne.s32.totalorder %s77, %s80
      %p89 = scmp.eq.s32.totalorder %s30, 3
      %p90 = por %p88, %p89
      %p91 = scmp.ne.s32.totalorder %s80, %s81
      %p92 = scmp.eq.s32.totalorder %s30, 0
      %p93 = por %p91, %p92
      %p94 = scmp.ne.s32.totalorder %s80, %s81
      %p95 = scmp.eq.s32.totalorder %s31, 3
      %p96 = por %p94, %p95
      %p98 = scmp.ne.s32.totalorder %s81, %s97
      %p99 = scmp.eq.s32.totalorder %s31, 0
      %p100 = por %p98, %p99
      %s101 = ssub.s32 %s33, %s40
      %p102 = scmp.eq.s32.totalorder %s101, 0
      %s104 = sadd.s32 %s103, 1
      %s105 = scalar_select %p102, %s103, %s104
      %p108 = pneg %p102
      %p109 = scmp.eq.s32.totalorder %s25, 3
      %p110 = por %p108, %p109
      %p111 = scmp.ne.s32.totalorder %s103, %s106
      %p112 = scmp.eq.s32.totalorder %s25, 0
      %p113 = por %p111, %p112
      %p114 = scmp.ne.s32.totalorder %s103, %s106
      %p115 = scmp.eq.s32.totalorder %s30, 3
      %p116 = por %p114, %p115
      %p117 = scmp.ne.s32.totalorder %s106, %s107
      %p118 = scmp.eq.s32.totalorder %s30, 0
      %p119 = por %p117, %p118
      %p120 = scmp.ne.s32.totalorder %s106, %s107
      %p121 = scmp.eq.s32.totalorder %s31, 3
      %p122 = por %p120, %p121
      %p124 = scmp.ne.s32.totalorder %s107, %s123
      %p125 = scmp.eq.s32.totalorder %s31, 0
      %p126 = por %p124, %p125
      %s128 = sadd.s32 %s127, 1
      %p131 = scmp.eq.s32.totalorder %s25, 3
      %p132 = scmp.ne.s32.totalorder %s127, %s129
      %p133 = scmp.eq.s32.totalorder %s25, 0
      %p134 = por %p132, %p133
      %p135 = scmp.ne.s32.totalorder %s127, %s129
      %p136 = scmp.eq.s32.totalorder %s30, 3
      %p137 = por %p135, %p136
      %p138 = scmp.ne.s32.totalorder %s129, %s130
      %p139 = scmp.eq.s32.totalorder %s30, 0
      %p140 = por %p138, %p139
      %p141 = scmp.ne.s32.totalorder %s129, %s130
      %p142 = scmp.eq.s32.totalorder %s31, 3
      %p143 = por %p141, %p142
      %p145 = scmp.ne.s32.totalorder %s130, %s144
      %p146 = scmp.eq.s32.totalorder %s31, 0
      %p147 = por %p145, %p146
      %s149 = sadd.s32 %s148, 1
      %p152 = scmp.eq.s32.totalorder %s25, 3
      %p153 = scmp.ne.s32.totalorder %s148, %s150
      %p154 = scmp.eq.s32.totalorder %s25, 0
      %p155 = por %p153, %p154
      %p156 = scmp.ne.s32.totalorder %s148, %s150
      %p157 = scmp.eq.s32.totalorder %s30, 3
      %p158 = por %p156, %p157
      %p159 = scmp.ne.s32.totalorder %s150, %s151
      %p160 = scmp.eq.s32.totalorder %s30, 0
      %p161 = por %p159, %p160
      %p162 = scmp.ne.s32.totalorder %s150, %s151
      %p163 = scmp.eq.s32.totalorder %s31, 3
      %p164 = por %p162, %p163
      %p166 = scmp.ne.s32.totalorder %s151, %s165
      %p167 = scmp.eq.s32.totalorder %s31, 0
      %p168 = por %p166, %p167
      %s170 = sadd.s32 %s169, 1
      %p173 = scmp.eq.s32.totalorder %s25, 3
      %p174 = scmp.ne.s32.totalorder %s169, %s171
      %p175 = scmp.eq.s32.totalorder %s25, 0
      %p176 = por %p174, %p175
      %p177 = scmp.ne.s32.totalorder %s169, %s171
      %p178 = scmp.eq.s32.totalorder %s30, 3
      %p179 = por %p177, %p178
      %p180 = scmp.ne.s32.totalorder %s171, %s172
      %p181 = scmp.eq.s32.totalorder %s30, 0
      %p182 = por %p180, %p181
      %p183 = scmp.ne.s32.totalorder %s171, %s172
      %p184 = scmp.eq.s32.totalorder %s31, 3
      %p185 = por %p183, %p184
      %p187 = scmp.ne.s32.totalorder %s172, %s186
      %p188 = scmp.eq.s32.totalorder %s31, 0
      %p189 = por %p187, %p188
      %s191 = sadd.s32 %s190, 1
      %p194 = scmp.eq.s32.totalorder %s25, 3
      %p195 = scmp.ne.s32.totalorder %s190, %s192
      %p196 = scmp.eq.s32.totalorder %s25, 0
      %p197 = por %p195, %p196
      %p198 = scmp.ne.s32.totalorder %s190, %s192
      %p199 = scmp.eq.s32.totalorder %s30, 3
      %p200 = por %p198, %p199
      %p201 = scmp.ne.s32.totalorder %s192, %s193
      %p202 = scmp.eq.s32.totalorder %s30, 0
      %p203 = por %p201, %p202
      %p204 = scmp.ne.s32.totalorder %s192, %s193
      %p205 = scmp.eq.s32.totalorder %s31, 3
      %p206 = por %p204, %p205
      %p208 = scmp.ne.s32.totalorder %s193, %s207
      %p209 = scmp.eq.s32.totalorder %s31, 0
      %p210 = por %p208, %p209
      %s212 = sadd.s32 %s211, 1
      %p215 = scmp.eq.s32.totalorder %s25, 3
      %p216 = scmp.ne.s32.totalorder %s211, %s213
      %p217 = scmp.eq.s32.totalorder %s25, 0
      %p218 = por %p216, %p217
      %p219 = scmp.ne.s32.totalorder %s211, %s213
      %p220 = scmp.eq.s32.totalorder %s30, 3
      %p221 = por %p219, %p220
      %p222 = scmp.ne.s32.totalorder %s213, %s214
      %p223 = scmp.eq.s32.totalorder %s30, 0
      %p224 = por %p222, %p223
      %p225 = scmp.ne.s32.totalorder %s213, %s214
      %p226 = scmp.eq.s32.totalorder %s31, 3
      %p227 = por %p225, %p226
      %p229 = scmp.ne.s32.totalorder %s214, %s228
      %p230 = scmp.eq.s32.totalorder %s31, 0
      %p231 = por %p229, %p230
      %s232 = ssub.s32 %s32, %s44
      %p233 = scmp.eq.s32.totalorder %s232, 0
      %s235 = sadd.s32 %s234, 1
      %s236 = scalar_select %p233, %s234, %s235
      %p239 = pneg %p233
      %p240 = scmp.eq.s32.totalorder %s25, 3
      %p241 = por %p239, %p240
      %p242 = scmp.ne.s32.totalorder %s234, %s237
      %p243 = scmp.eq.s32.totalorder %s25, 0
      %p244 = por %p242, %p243
      %p245 = scmp.ne.s32.totalorder %s234, %s237
      %p246 = scmp.eq.s32.totalorder %s30, 3
      %p247 = por %p245, %p246
      %p248 = scmp.ne.s32.totalorder %s237, %s238
      %p249 = scmp.eq.s32.totalorder %s30, 0
      %p250 = por %p248, %p249
      %p251 = scmp.ne.s32.totalorder %s237, %s238
      %p252 = scmp.eq.s32.totalorder %s31, 3
      %p253 = por %p251, %p252
      %p255 = scmp.ne.s32.totalorder %s238, %s254
      %p256 = scmp.eq.s32.totalorder %s31, 0
      %p257 = por %p255, %p256
      %s258 = ssub.s32 %s32, %s44
      %p259 = scmp.eq.s32.totalorder %s258, 0
      %s261 = sadd.s32 %s260, 1
      %s262 = scalar_select %p259, %s260, %s261
      %p265 = pneg %p259
      %p266 = scmp.eq.s32.totalorder %s25, 3
      %p267 = por %p265, %p266
      %p268 = scmp.ne.s32.totalorder %s260, %s263
      %p269 = scmp.eq.s32.totalorder %s25, 0
      %p270 = por %p268, %p269
      %p271 = scmp.ne.s32.totalorder %s260, %s263
      %p272 = scmp.eq.s32.totalorder %s30, 3
      %p273 = por %p271, %p272
      %p274 = scmp.ne.s32.totalorder %s263, %s264
      %p275 = scmp.eq.s32.totalorder %s30, 0
      %p276 = por %p274, %p275
      %p277 = scmp.ne.s32.totalorder %s263, %s264
      %p278 = scmp.eq.s32.totalorder %s31, 3
      %p279 = por %p277, %p278
      %p281 = scmp.ne.s32.totalorder %s264, %s280
      %p282 = scmp.eq.s32.totalorder %s31, 0
      %p283 = por %p281, %p282
      %p284 = scmp.le.s32.totalorder 1, %s25
      %p285 = scmp.lt.s32.totalorder %s25, 5
      %p286 = pnand %p284, %p285
      %p287 = pneg %p286
      // Predicated region
      $region9: #{tpu_custom_call.1} parent=5 // pred_check
        _
      $region10: #{tpu_custom_call.1} parent=5 // pred_check_branch
        %289 = sbr.rel (%p286) target = $region12
      $region11: #{tpu_custom_call.1} parent=5 // pred_region
        %s290 = ssub.s32 %s25, 1
        // Predicated region
        $region13: #{tpu_custom_call.1} parent=11 // pred_check
          %p291 = pneg %p140
        $region14: #{tpu_custom_call.1} parent=11 // pred_check_branch
          %293 = sbr.rel (%p291) target = $region16
        $region15: #{tpu_custom_call.1} parent=11 // pred_region
          _
        $region16: #{tpu_custom_call.1} parent=11 // pred_fallthru
          _
        // Predicated region
        $region17: #{tpu_custom_call.1} parent=11 // pred_check
          %p294 = pneg %p161
        $region18: #{tpu_custom_call.1} parent=11 // pred_check_branch
          %296 = sbr.rel (%p294) target = $region20
        $region19: #{tpu_custom_call.1} parent=11 // pred_region
          %298 = vsyncadd [#allocation10], 0
          %s299 = sshll.u32 %s4, 4
          %s300 = int_to_ptr.hbm [resolvable:$true] %s299
          %s301 = sshll.u32 [#allocation9], 4
          %s302 = int_to_ptr.vmem [resolvable:$true] %s301
          %307 = dma.hbm_to_vmem [thread:$0]  %s300, 2048, %s302, [#allocation10], 64, 64, 4
        $region20: #{tpu_custom_call.1} parent=11 // pred_fallthru
          _
        // Predicated region
        $region21: #{tpu_custom_call.1} parent=11 // pred_check
          %p308 = pneg %p182
        $region22: #{tpu_custom_call.1} parent=11 // pred_check_branch
          %310 = sbr.rel (%p308) target = $region24
        $region23: #{tpu_custom_call.1} parent=11 // pred_region
          _
        $region24: #{tpu_custom_call.1} parent=11 // pred_fallthru
          _
        // Predicated region
        $region25: #{tpu_custom_call.1} parent=11 // pred_check
          %p311 = pneg %p203
        $region26: #{tpu_custom_call.1} parent=11 // pred_check_branch
          %313 = sbr.rel (%p311) target = $region28
        $region27: #{tpu_custom_call.1} parent=11 // pred_region
          %315 = vsyncadd [#allocation10], 0
          %s316 = sshll.u32 %s6, 4
          %s317 = int_to_ptr.hbm [resolvable:$true] %s316
          %s318 = sshll.u32 [#allocation11], 4
          %s319 = int_to_ptr.vmem [resolvable:$true] %s318
          %324 = dma.hbm_to_vmem [thread:$0]  %s317, 1024, %s319, [#allocation10], 64, 64, 4
        $region28: #{tpu_custom_call.1} parent=11 // pred_fallthru
          _
        // Predicated region
        $region29: #{tpu_custom_call.1} parent=11 // pred_check
          %p325 = pneg %p224
        $region30: #{tpu_custom_call.1} parent=11 // pred_check_branch
          %327 = sbr.rel (%p325) target = $region32
        $region31: #{tpu_custom_call.1} parent=11 // pred_region
          _
        $region32: #{tpu_custom_call.1} parent=11 // pred_fallthru
          _
      $region12: #{tpu_custom_call.1} parent=5 // pred_fallthru
        _
      %p328 = scmp.lt.s32.totalorder %s25, 4
      // Predicated region
      $region33: #{tpu_custom_call.1} parent=5 // pred_check
        %p329 = pneg %p328
      $region34: #{tpu_custom_call.1} parent=5 // pred_check_branch
        %331 = sbr.rel (%p329) target = $region36
      $region35: #{tpu_custom_call.1} parent=5 // pred_region
        // Predicated region
        $region37: #{tpu_custom_call.1} parent=35 // pred_check
          %p332 = pneg %p59
        $region38: #{tpu_custom_call.1} parent=35 // pred_check_branch
          %334 = sbr.rel (%p332) target = $region40
        $region39: #{tpu_custom_call.1} parent=35 // pred_region
          %s335 = sand.u32 %s49, 1
          %s336 = scalar_lea.sflag [#allocation4], %s335
          %s337 = sand.u32 %s49, 1
          %s338 = smul.addr %s337, 32
          %s339 = scalar_lea.vmem [#allocation3], %s338
          %s340 = smul.u32 2, %s32
          %s341 = smul.u32 2, %s33
          %343 = vsyncadd %s336, 0
          %s344 = smul.addr %s340, 8
          %s345 = sadd.s32 %s341, %s344
          %s346 = smul.addr %s345, 8
          %s347 = scalar_lea.hbm %s0, %s346
          %s348 = sshll.u32 %s347, 4
          %s349 = int_to_ptr.hbm [resolvable:$true] %s348
          %s350 = sshll.u32 %s339, 4
          %s351 = int_to_ptr.vmem [resolvable:$true] %s350
          %356 = dma.hbm_to_vmem [thread:$0]  %s349, 512, %s351, %s336, 1024, 256, 16
        $region40: #{tpu_custom_call.1} parent=35 // pred_fallthru
          _
        // Predicated region
        $region41: #{tpu_custom_call.1} parent=35 // pred_check
          %p357 = pneg %p87
        $region42: #{tpu_custom_call.1} parent=35 // pred_check_branch
          %359 = sbr.rel (%p357) target = $region44
        $region43: #{tpu_custom_call.1} parent=35 // pred_region
          %s360 = sand.u32 %s25, 1
          %s361 = scalar_lea.sflag [#allocation7], %s360
          %s362 = sand.u32 %s77, 1
          %s363 = smul.addr %s362, 32
          %s364 = scalar_lea.vmem [#allocation6], %s363
          %s365 = smul.u32 2, %s32
          %s366 = smul.u32 2, %s33
          %368 = vsyncadd %s361, 0
          %s369 = smul.addr %s365, 8
          %s370 = sadd.s32 %s366, %s369
          %s371 = smul.addr %s370, 8
          %s372 = scalar_lea.hbm %s1, %s371
          %s373 = sshll.u32 %s372, 4
          %s374 = int_to_ptr.hbm [resolvable:$true] %s373
          %s375 = sshll.u32 %s364, 4
          %s376 = int_to_ptr.vmem [resolvable:$true] %s375
          %381 = dma.hbm_to_vmem [thread:$0]  %s374, 512, %s376, %s361, 1024, 256, 16
        $region44: #{tpu_custom_call.1} parent=35 // pred_fallthru
          _
        // Predicated region
        $region45: #{tpu_custom_call.1} parent=35 // pred_check
          %p382 = pneg %p113
        $region46: #{tpu_custom_call.1} parent=35 // pred_check_branch
          %384 = sbr.rel (%p382) target = $region48
        $region47: #{tpu_custom_call.1} parent=35 // pred_region
          %s385 = sand.u32 %s25, 1
          %s386 = scalar_lea.sflag [#allocation7], %s385
          %s387 = sand.u32 %s103, 1
          %s388 = smul.addr %s387, 256
          %s389 = scalar_lea.vmem [#allocation8], %s388
          %s390 = smul.u32 32, %s33
          %392 = vsyncadd %s386, 0
          %s393 = smul.addr %s390, 2
          %s394 = smul.addr %s393, 4
          %s395 = scalar_lea.hbm %s2, %s394
          %s396 = sshll.u32 %s395, 4
          %s397 = int_to_ptr.hbm [resolvable:$true] %s396
          %s398 = sshll.u32 %s389, 4
          %s399 = int_to_ptr.vmem [resolvable:$true] %s398
          %404 = dma.hbm_to_vmem [thread:$0]  %s397, 4096, %s399, %s386, 128, 128, 8
        $region48: #{tpu_custom_call.1} parent=35 // pred_fallthru
          _
      $region36: #{tpu_custom_call.1} parent=5 // pred_fallthru
        _
      %p405 = scmp.le.s32.totalorder 1, %s25
      %p406 = scmp.lt.s32.totalorder %s25, 5
      %p407 = pnand %p405, %p406
      %p408 = pneg %p407
      // Predicated region
      $region49: #{tpu_custom_call.1} parent=5 // pred_check
        _
      $region50: #{tpu_custom_call.1} parent=5 // pred_check_branch
        %410 = sbr.rel (%p407) target = $region52
      $region51: #{tpu_custom_call.1} parent=5 // pred_region
        %s411 = ssub.s32 %s25, 1
        %s412 = sand.u32 %s52, 1
        %s413 = scalar_lea.sflag [#allocation4], %s412
        %s414 = sand.u32 %s52, 1
        %s415 = smul.addr %s414, 32
        %s416 = scalar_lea.vmem [#allocation3], %s415
        // Predicated region
        $region53: #{tpu_custom_call.1} parent=51 // pred_check
          %p417 = pneg %p65
        $region54: #{tpu_custom_call.1} parent=51 // pred_check_branch
          %419 = sbr.rel (%p417) target = $region56
        $region55: #{tpu_custom_call.1} parent=51 // pred_region
          %421 = dma.done %s413, 512
        $region56: #{tpu_custom_call.1} parent=51 // pred_fallthru
          _
        %s422 = sand.u32 %s30, 1
        %s423 = scalar_lea.sflag [#allocation7], %s422
        %s424 = sand.u32 %s80, 1
        %s425 = smul.addr %s424, 32
        %s426 = scalar_lea.vmem [#allocation6], %s425
        // Predicated region
        $region57: #{tpu_custom_call.1} parent=51 // pred_check
          %p427 = pneg %p93
        $region58: #{tpu_custom_call.1} parent=51 // pred_check_branch
          %429 = sbr.rel (%p427) target = $region60
        $region59: #{tpu_custom_call.1} parent=51 // pred_region
          %431 = dma.done %s423, 512
        $region60: #{tpu_custom_call.1} parent=51 // pred_fallthru
          _
        %s432 = sand.u32 %s30, 1
        %s433 = scalar_lea.sflag [#allocation7], %s432
        %s434 = sand.u32 %s106, 1
        %s435 = smul.addr %s434, 256
        %s436 = scalar_lea.vmem [#allocation8], %s435
        // Predicated region
        $region61: #{tpu_custom_call.1} parent=51 // pred_check
          %p437 = pneg %p119
        $region62: #{tpu_custom_call.1} parent=51 // pred_check_branch
          %439 = sbr.rel (%p437) target = $region64
        $region63: #{tpu_custom_call.1} parent=51 // pred_region
          %441 = dma.done %s433, 4096
        $region64: #{tpu_custom_call.1} parent=51 // pred_fallthru
          _
        // Predicated region
        $region65: #{tpu_custom_call.1} parent=51 // pred_check
          %p442 = pneg %p161
        $region66: #{tpu_custom_call.1} parent=51 // pred_check_branch
          %444 = sbr.rel (%p442) target = $region68
        $region67: #{tpu_custom_call.1} parent=51 // pred_region
          %446 = dma.done [#allocation10], 2048
        $region68: #{tpu_custom_call.1} parent=51 // pred_fallthru
          _
        // Predicated region
        $region69: #{tpu_custom_call.1} parent=51 // pred_check
          %p447 = pneg %p203
        $region70: #{tpu_custom_call.1} parent=51 // pred_check_branch
          %449 = sbr.rel (%p447) target = $region72
        $region71: #{tpu_custom_call.1} parent=51 // pred_region
          %451 = dma.done [#allocation10], 1024
        $region72: #{tpu_custom_call.1} parent=51 // pred_fallthru
          _
        %s452 = sand.u32 %s52, 1
        %s453 = scalar_lea.sflag [#allocation4], %s452
        %s454 = sand.u32 %s52, 1
        %s455 = smul.addr %s454, 32
        %s456 = scalar_lea.vmem [#allocation3], %s455
        %p457 = pneg %p65
        %p458 = pneg %p62
        %s459 = sand.u32 %s30, 1
        %s460 = scalar_lea.sflag [#allocation7], %s459
        %s461 = sand.u32 %s80, 1
        %s462 = smul.addr %s461, 32
        %s463 = scalar_lea.vmem [#allocation6], %s462
        %p464 = pneg %p93
        %p465 = pneg %p90
        %s466 = sand.u32 %s30, 1
        %s467 = scalar_lea.sflag [#allocation7], %s466
        %s468 = sand.u32 %s106, 1
        %s469 = smul.addr %s468, 256
        %s470 = scalar_lea.vmem [#allocation8], %s469
        %p471 = pneg %p119
        %p472 = pneg %p116
        %p473 = pneg %p140
        %p474 = pneg %p137
        %p475 = pneg %p161
        %p476 = pneg %p158
        %p477 = pneg %p182
        %p478 = pneg %p179
        %p479 = pneg %p203
        %p480 = pneg %p200
        %p481 = pneg %p224
        %p482 = pneg %p221
        %p483 = pneg %p250
        %p484 = pneg %p247
        %p485 = pneg %p276
        %p486 = pneg %p273
        %s487 = smul.u32 2, %s34
        %s488 = smul.u32 2, %s35
        %s489 = smul.u32 2, %s34
        %s490 = smul.u32 2, %s35
        %s491 = smul.u32 32, %s35
        %s492 = smul.u32 2, %s34
        %s493 = smul.u32 2, %s34
        %p494 = scmp.eq.s32.totalorder %s35, 0
        // Predicated region
        $region73: #{tpu_custom_call.1} parent=51 // pred_check
          %p495 = pneg %p494
        $region74: #{tpu_custom_call.1} parent=51 // pred_check_branch
          %497 = sbr.rel (%p495) target = $region76
        $region75: #{tpu_custom_call.1} parent=51 // pred_region
          %498 = vst [vmem:[#allocation2] sm:$0xff] 0.0
          %499 = vst [vmem:[#allocation2 + $0x8] sm:$0xff] 0.0
          %500 = vst [vmem:[#allocation2 + $0x10] sm:$0xff] 0.0
          %501 = vst [vmem:[#allocation2 + $0x18] sm:$0xff] 0.0
          %502 = vst [vmem:[#allocation2 + $0x20] sm:$0xff] 0.0
          %503 = vst [vmem:[#allocation2 + $0x28] sm:$0xff] 0.0
          %504 = vst [vmem:[#allocation2 + $0x30] sm:$0xff] 0.0
          %505 = vst [vmem:[#allocation2 + $0x38] sm:$0xff] 0.0
        $region76: #{tpu_custom_call.1} parent=51 // pred_fallthru
          _
        %v506 = vld [vmem:[%s416] sm:$0xff]
        %v507 = vld [vmem:[%s416 + $0x8] sm:$0xff]
        %v508 = vld [vmem:[%s416 + $0x10] sm:$0xff]
        %v509 = vld [vmem:[%s416 + $0x18] sm:$0xff]
        %v510 = vpack.c.bf16 %v507, %v506
        %v511 = vpack.c.bf16 %v509, %v508
        %v512 = vld [vmem:[%s426] sm:$0xff]
        %v513 = vld [vmem:[%s426 + $0x8] sm:$0xff]
        %v514 = vld [vmem:[%s426 + $0x10] sm:$0xff]
        %v515 = vld [vmem:[%s426 + $0x18] sm:$0xff]
        %v516 = vpack.c.bf16 %v513, %v512
        %v517 = vpack.c.bf16 %v515, %v514
        %v520 = vunpack.c.l.b16 %v510
        %v521 = vunpack.c.h.b16 %v510
        %v522 = vunpack.c.l.b16 %v511
        %v523 = vunpack.c.h.b16 %v511
        %v524 = vpack.c.b16 %v522, %v520
        %v525 = vpack.c.b16 %v523, %v521
        %v530 = vunpack.c.l.b16 %v516
        %v531 = vunpack.c.h.b16 %v516
        %v532 = vunpack.c.l.b16 %v517
        %v533 = vunpack.c.h.b16 %v517
        %v534 = vpack.c.b16 %v532, %v530
        %v535 = vpack.c.b16 %v533, %v531
        %v538 = vld [vmem:[#allocation2] sm:$0xff]
        %v539 = vld [vmem:[#allocation2 + $0x8] sm:$0xff]
        %v540 = vld [vmem:[#allocation2 + $0x10] sm:$0xff]
        %v541 = vld [vmem:[#allocation2 + $0x18] sm:$0xff]
        %v542 = vld [vmem:[#allocation2 + $0x20] sm:$0xff]
        %v543 = vld [vmem:[#allocation2 + $0x28] sm:$0xff]
        %v544 = vld [vmem:[#allocation2 + $0x30] sm:$0xff]
        %v545 = vld [vmem:[#allocation2 + $0x38] sm:$0xff]
        %v546 = vld [vmem:[%s436] sm:$0xff]
        %v547 = vld [vmem:[%s436 + $0x8] sm:$0xff]
        %v548 = vld [vmem:[%s436 + $0x10] sm:$0xff]
        %v549 = vld [vmem:[%s436 + $0x18] sm:$0xff]
        %v550 = vld [vmem:[%s436 + $0x20] sm:$0xff]
        %v551 = vld [vmem:[%s436 + $0x28] sm:$0xff]
        %v552 = vld [vmem:[%s436 + $0x30] sm:$0xff]
        %v553 = vld [vmem:[%s436 + $0x38] sm:$0xff]
        %v554 = vld [vmem:[%s436 + $0x40] sm:$0xff]
        %v555 = vld [vmem:[%s436 + $0x48] sm:$0xff]
        %v556 = vld [vmem:[%s436 + $0x50] sm:$0xff]
        %v557 = vld [vmem:[%s436 + $0x58] sm:$0xff]
        %v558 = vld [vmem:[%s436 + $0x60] sm:$0xff]
        %v559 = vld [vmem:[%s436 + $0x68] sm:$0xff]
        %v560 = vld [vmem:[%s436 + $0x70] sm:$0xff]
        %v561 = vld [vmem:[%s436 + $0x78] sm:$0xff]
        %v562 = vld [vmem:[%s436 + $0x80] sm:$0xff]
        %v563 = vld [vmem:[%s436 + $0x88] sm:$0xff]
        %v564 = vld [vmem:[%s436 + $0x90] sm:$0xff]
        %v565 = vld [vmem:[%s436 + $0x98] sm:$0xff]
        %v566 = vld [vmem:[%s436 + $0xa0] sm:$0xff]
        %v567 = vld [vmem:[%s436 + $0xa8] sm:$0xff]
        %v568 = vld [vmem:[%s436 + $0xb0] sm:$0xff]
        %v569 = vld [vmem:[%s436 + $0xb8] sm:$0xff]
        %v570 = vld [vmem:[%s436 + $0xc0] sm:$0xff]
        %v571 = vld [vmem:[%s436 + $0xc8] sm:$0xff]
        %v572 = vld [vmem:[%s436 + $0xd0] sm:$0xff]
        %v573 = vld [vmem:[%s436 + $0xd8] sm:$0xff]
        %v574 = vld [vmem:[%s436 + $0xe0] sm:$0xff]
        %v575 = vld [vmem:[%s436 + $0xe8] sm:$0xff]
        %v576 = vld [vmem:[%s436 + $0xf0] sm:$0xff]
        %v577 = vld [vmem:[%s436 + $0xf8] sm:$0xff]
        %v610 = vunpack.c.l.b16 %v546
        %v611 = vunpack.c.h.b16 %v546
        %v612 = vunpack.c.l.b16 %v547
        %v613 = vunpack.c.h.b16 %v547
        %v614 = vunpack.c.l.b16 %v548
        %v615 = vunpack.c.h.b16 %v548
        %v616 = vunpack.c.l.b16 %v549
        %v617 = vunpack.c.h.b16 %v549
        %v618 = vunpack.c.l.b16 %v550
        %v619 = vunpack.c.h.b16 %v550
        %v620 = vunpack.c.l.b16 %v551
        %v621 = vunpack.c.h.b16 %v551
        %v622 = vunpack.c.l.b16 %v552
        %v623 = vunpack.c.h.b16 %v552
        %v624 = vunpack.c.l.b16 %v553
        %v625 = vunpack.c.h.b16 %v553
        %v626 = vunpack.c.l.b16 %v554
        %v627 = vunpack.c.h.b16 %v554
        %v628 = vunpack.c.l.b16 %v555
        %v629 = vunpack.c.h.b16 %v555
        %v630 = vunpack.c.l.b16 %v556
        %v631 = vunpack.c.h.b16 %v556
        %v632 = vunpack.c.l.b16 %v557
        %v633 = vunpack.c.h.b16 %v557
        %v634 = vunpack.c.l.b16 %v558
        %v635 = vunpack.c.h.b16 %v558
        %v636 = vunpack.c.l.b16 %v559
        %v637 = vunpack.c.h.b16 %v559
        %v638 = vunpack.c.l.b16 %v560
        %v639 = vunpack.c.h.b16 %v560
        %v640 = vunpack.c.l.b16 %v561
        %v641 = vunpack.c.h.b16 %v561
        %v642 = vunpack.c.l.b16 %v562
        %v643 = vunpack.c.h.b16 %v562
        %v644 = vunpack.c.l.b16 %v563
        %v645 = vunpack.c.h.b16 %v563
        %v646 = vunpack.c.l.b16 %v564
        %v647 = vunpack.c.h.b16 %v564
        %v648 = vunpack.c.l.b16 %v565
        %v649 = vunpack.c.h.b16 %v565
        %v650 = vunpack.c.l.b16 %v566
        %v651 = vunpack.c.h.b16 %v566
        %v652 = vunpack.c.l.b16 %v567
        %v653 = vunpack.c.h.b16 %v567
        %v654 = vunpack.c.l.b16 %v568
        %v655 = vunpack.c.h.b16 %v568
        %v656 = vunpack.c.l.b16 %v569
        %v657 = vunpack.c.h.b16 %v569
        %v658 = vunpack.c.l.b16 %v570
        %v659 = vunpack.c.h.b16 %v570
        %v660 = vunpack.c.l.b16 %v571
        %v661 = vunpack.c.h.b16 %v571
        %v662 = vunpack.c.l.b16 %v572
        %v663 = vunpack.c.h.b16 %v572
        %v664 = vunpack.c.l.b16 %v573
        %v665 = vunpack.c.h.b16 %v573
        %v666 = vunpack.c.l.b16 %v574
        %v667 = vunpack.c.h.b16 %v574
        %v668 = vunpack.c.l.b16 %v575
        %v669 = vunpack.c.h.b16 %v575
        %v670 = vunpack.c.l.b16 %v576
        %v671 = vunpack.c.h.b16 %v576
        %v672 = vunpack.c.l.b16 %v577
        %v673 = vunpack.c.h.b16 %v577
        %v674 = vpack.c.b16 %v612, %v610
        %v675 = vpack.c.b16 %v613, %v611
        %v676 = vpack.c.b16 %v616, %v614
        %v677 = vpack.c.b16 %v617, %v615
        %v678 = vpack.c.b16 %v620, %v618
        %v679 = vpack.c.b16 %v621, %v619
        %v680 = vpack.c.b16 %v624, %v622
        %v681 = vpack.c.b16 %v625, %v623
        %v682 = vpack.c.b16 %v628, %v626
        %v683 = vpack.c.b16 %v629, %v627
        %v684 = vpack.c.b16 %v632, %v630
        %v685 = vpack.c.b16 %v633, %v631
        %v686 = vpack.c.b16 %v636, %v634
        %v687 = vpack.c.b16 %v637, %v635
        %v688 = vpack.c.b16 %v640, %v638
        %v689 = vpack.c.b16 %v641, %v639
        %v690 = vpack.c.b16 %v644, %v642
        %v691 = vpack.c.b16 %v645, %v643
        %v692 = vpack.c.b16 %v648, %v646
        %v693 = vpack.c.b16 %v649, %v647
        %v694 = vpack.c.b16 %v652, %v650
        %v695 = vpack.c.b16 %v653, %v651
        %v696 = vpack.c.b16 %v656, %v654
        %v697 = vpack.c.b16 %v657, %v655
        %v698 = vpack.c.b16 %v660, %v658
        %v699 = vpack.c.b16 %v661, %v659
        %v700 = vpack.c.b16 %v664, %v662
        %v701 = vpack.c.b16 %v665, %v663
        %v702 = vpack.c.b16 %v668, %v666
        %v703 = vpack.c.b16 %v669, %v667
        %v704 = vpack.c.b16 %v672, %v670
        %v705 = vpack.c.b16 %v673, %v671
        %738 = vmatpush.bf16.msra.mxu0 %v688
        %739 = vmatpush.bf16.msra.mxu0 %v686
        %740 = vmatpush.bf16.msra.mxu0 %v684
        %741 = vmatpush.bf16.msra.mxu0 %v682
        %742 = vmatpush.bf16.msra.mxu0 %v680
        %743 = vmatpush.bf16.msra.mxu0 %v678
        %744 = vmatpush.bf16.msra.mxu0 %v676
        %745 = vmatpush.bf16.msra.mxu0 %v674
        %746 = vmatmul.bf16.gmra.mxu0 %v524
        %v747 = vpop.f32.mrf.mxu0
        %v748 = vadd.f32 0.0, %v747
        %v749 = vpop.f32.mrf.mxu0
        %v750 = vadd.f32 0.0, %v749
        %751 = vmatmul.bf16.gmra.mxu0 %v534
        %v752 = vpop.f32.mrf.mxu0
        %v753 = vadd.f32 0.0, %v752
        %v754 = vpop.f32.mrf.mxu0
        %v755 = vadd.f32 0.0, %v754
        %756 = vdwg.mxu0
        %757 = vmatpush.bf16.msra.mxu0 %v704
        %758 = vmatpush.bf16.msra.mxu0 %v702
        %759 = vmatpush.bf16.msra.mxu0 %v700
        %760 = vmatpush.bf16.msra.mxu0 %v698
        %761 = vmatpush.bf16.msra.mxu0 %v696
        %762 = vmatpush.bf16.msra.mxu0 %v694
        %763 = vmatpush.bf16.msra.mxu0 %v692
        %764 = vmatpush.bf16.msra.mxu0 %v690
        %765 = vmatmul.bf16.gmra.mxu0 %v525
        %v766 = vpop.f32.mrf.mxu0
        %v767 = vadd.f32 %v748, %v766
        %v768 = vpop.f32.mrf.mxu0
        %v769 = vadd.f32 %v750, %v768
        %770 = vmatmul.bf16.gmra.mxu0 %v535
        %v771 = vpop.f32.mrf.mxu0
        %v772 = vadd.f32 %v753, %v771
        %v773 = vpop.f32.mrf.mxu0
        %v774 = vadd.f32 %v755, %v773
        %775 = vdwg.mxu0
        %776 = vmatpush.bf16.msra.mxu0 %v689
        %777 = vmatpush.bf16.msra.mxu0 %v687
        %778 = vmatpush.bf16.msra.mxu0 %v685
        %779 = vmatpush.bf16.msra.mxu0 %v683
        %780 = vmatpush.bf16.msra.mxu0 %v681
        %781 = vmatpush.bf16.msra.mxu0 %v679
        %782 = vmatpush.bf16.msra.mxu0 %v677
        %783 = vmatpush.bf16.msra.mxu0 %v675
        %784 = vmatmul.bf16.gmra.mxu0 %v524
        %v785 = vpop.f32.mrf.mxu0
        %v786 = vadd.f32 0.0, %v785
        %v787 = vpop.f32.mrf.mxu0
        %v788 = vadd.f32 0.0, %v787
        %789 = vmatmul.bf16.gmra.mxu0 %v534
        %v790 = vpop.f32.mrf.mxu0
        %v791 = vadd.f32 0.0, %v790
        %v792 = vpop.f32.mrf.mxu0
        %v793 = vadd.f32 0.0, %v792
        %794 = vdwg.mxu0
        %795 = vmatpush.bf16.msra.mxu0 %v705
        %796 = vmatpush.bf16.msra.mxu0 %v703
        %797 = vmatpush.bf16.msra.mxu0 %v701
        %798 = vmatpush.bf16.msra.mxu0 %v699
        %799 = vmatpush.bf16.msra.mxu0 %v697
        %800 = vmatpush.bf16.msra.mxu0 %v695
        %801 = vmatpush.bf16.msra.mxu0 %v693
        %802 = vmatpush.bf16.msra.mxu0 %v691
        %803 = vmatmul.bf16.gmra.mxu0 %v525
        %v804 = vpop.f32.mrf.mxu0
        %v805 = vadd.f32 %v786, %v804
        %v806 = vpop.f32.mrf.mxu0
        %v807 = vadd.f32 %v788, %v806
        %808 = vmatmul.bf16.gmra.mxu0 %v535
        %v809 = vpop.f32.mrf.mxu0
        %v810 = vadd.f32 %v791, %v809
        %v811 = vpop.f32.mrf.mxu0
        %v812 = vadd.f32 %v793, %v811
        %813 = vdwg.mxu0
        %v814 = vadd.f32 %v538, %v767
        %v815 = vadd.f32 %v539, %v805
        %v816 = vadd.f32 %v540, %v769
        %v817 = vadd.f32 %v541, %v807
        %v818 = vadd.f32 %v542, %v772
        %v819 = vadd.f32 %v543, %v810
        %v820 = vadd.f32 %v544, %v774
        %v821 = vadd.f32 %v545, %v812
        %822 = vst [vmem:[#allocation2] sm:$0xff] %v814
        %823 = vst [vmem:[#allocation2 + $0x8] sm:$0xff] %v815
        %824 = vst [vmem:[#allocation2 + $0x10] sm:$0xff] %v816
        %825 = vst [vmem:[#allocation2 + $0x18] sm:$0xff] %v817
        %826 = vst [vmem:[#allocation2 + $0x20] sm:$0xff] %v818
        %827 = vst [vmem:[#allocation2 + $0x28] sm:$0xff] %v819
        %828 = vst [vmem:[#allocation2 + $0x30] sm:$0xff] %v820
        %829 = vst [vmem:[#allocation2 + $0x38] sm:$0xff] %v821
        %p830 = scmp.eq.s32.totalorder %s35, 3
        // Predicated region
        $region77: #{tpu_custom_call.1} parent=51 // pred_check
          %p831 = pneg %p830
        $region78: #{tpu_custom_call.1} parent=51 // pred_check_branch
          %833 = sbr.rel (%p831) target = $region80
        $region79: #{tpu_custom_call.1} parent=51 // pred_region
          %v834 = vld [vmem:[#allocation2] sm:$0xff]
          %v835 = vld [vmem:[#allocation2 + $0x8] sm:$0xff]
          %v836 = vld [vmem:[#allocation2 + $0x10] sm:$0xff]
          %v837 = vld [vmem:[#allocation2 + $0x18] sm:$0xff]
          %v838 = vld [vmem:[#allocation2 + $0x20] sm:$0xff]
          %v839 = vld [vmem:[#allocation2 + $0x28] sm:$0xff]
          %v840 = vld [vmem:[#allocation2 + $0x30] sm:$0xff]
          %v841 = vld [vmem:[#allocation2 + $0x38] sm:$0xff]
          %v842 = vld [vmem:[%s3] sm:$0x3]
          %v844 = vperm.slane %v842, 0
          %v845 = vperm.slane %v842, 1
          %v848 = vadd.f32 %v834, %v844
          %v849 = vadd.f32 %v835, %v845
          %v850 = vadd.f32 %v836, %v844
          %v851 = vadd.f32 %v837, %v845
          %v852 = vadd.f32 %v838, %v844
          %v853 = vadd.f32 %v839, %v845
          %v854 = vadd.f32 %v840, %v844
          %v855 = vadd.f32 %v841, %v845
          %v856 = vmax.f32 %v848, 0.0
          %v857 = vmax.f32 %v849, 0.0
          %v858 = vmax.f32 %v850, 0.0
          %v859 = vmax.f32 %v851, 0.0
          %v860 = vmax.f32 %v852, 0.0
          %v861 = vmax.f32 %v853, 0.0
          %v862 = vmax.f32 %v854, 0.0
          %v863 = vmax.f32 %v855, 0.0
          %v864 = vpack.c.bf16 %v858, %v856
          %v865 = vpack.c.bf16 %v859, %v857
          %v866 = vpack.c.bf16 %v862, %v860
          %v867 = vpack.c.bf16 %v863, %v861
          %v868 = vld [vmem:[#allocation9] sm:$0xf]
          %v869 = vld [vmem:[#allocation9 + $0x4] sm:$0xf]
          %v870 = vld [vmem:[#allocation9 + $0x8] sm:$0xf]
          %v871 = vld [vmem:[#allocation9 + $0xc] sm:$0xf]
          %v872 = vld [vmem:[#allocation9 + $0x10] sm:$0xf]
          %v873 = vld [vmem:[#allocation9 + $0x14] sm:$0xf]
          %v874 = vld [vmem:[#allocation9 + $0x18] sm:$0xf]
          %v875 = vld [vmem:[#allocation9 + $0x1c] sm:$0xf]
          %v876 = vld [vmem:[#allocation9 + $0x20] sm:$0xf]
          %v877 = vld [vmem:[#allocation9 + $0x24] sm:$0xf]
          %v878 = vld [vmem:[#allocation9 + $0x28] sm:$0xf]
          %v879 = vld [vmem:[#allocation9 + $0x2c] sm:$0xf]
          %v880 = vld [vmem:[#allocation9 + $0x30] sm:$0xf]
          %v881 = vld [vmem:[#allocation9 + $0x34] sm:$0xf]
          %v882 = vld [vmem:[#allocation9 + $0x38] sm:$0xf]
          %v883 = vld [vmem:[#allocation9 + $0x3c] sm:$0xf]
          %v884 = vld [vmem:[#allocation9 + $0x40] sm:$0xf]
          %v885 = vld [vmem:[#allocation9 + $0x44] sm:$0xf]
          %v886 = vld [vmem:[#allocation9 + $0x48] sm:$0xf]
          %v887 = vld [vmem:[#allocation9 + $0x4c] sm:$0xf]
          %v888 = vld [vmem:[#allocation9 + $0x50] sm:$0xf]
          %v889 = vld [vmem:[#allocation9 + $0x54] sm:$0xf]
          %v890 = vld [vmem:[#allocation9 + $0x58] sm:$0xf]
          %v891 = vld [vmem:[#allocation9 + $0x5c] sm:$0xf]
          %v892 = vld [vmem:[#allocation9 + $0x60] sm:$0xf]
          %v893 = vld [vmem:[#allocation9 + $0x64] sm:$0xf]
          %v894 = vld [vmem:[#allocation9 + $0x68] sm:$0xf]
          %v895 = vld [vmem:[#allocation9 + $0x6c] sm:$0xf]
          %v896 = vld [vmem:[#allocation9 + $0x70] sm:$0xf]
          %v897 = vld [vmem:[#allocation9 + $0x74] sm:$0xf]
          %v898 = vld [vmem:[#allocation9 + $0x78] sm:$0xf]
          %v899 = vld [vmem:[#allocation9 + $0x7c] sm:$0xf]
          %v900 = vld [vmem:[%s5] sm:$0x1]
          %v902 = vperm.slane %v900, 0
          %v936 = vunpack.c.l.b16 %v868
          %v937 = vunpack.c.l.b16 %v869
          %v938 = vunpack.c.l.b16 %v870
          %v939 = vunpack.c.l.b16 %v871
          %v940 = vunpack.c.l.b16 %v872
          %v941 = vunpack.c.l.b16 %v873
          %v942 = vunpack.c.l.b16 %v874
          %v943 = vunpack.c.l.b16 %v875
          %v944 = vunpack.c.l.b16 %v876
          %v945 = vunpack.c.l.b16 %v877
          %v946 = vunpack.c.l.b16 %v878
          %v947 = vunpack.c.l.b16 %v879
          %v948 = vunpack.c.l.b16 %v880
          %v949 = vunpack.c.l.b16 %v881
          %v950 = vunpack.c.l.b16 %v882
          %v951 = vunpack.c.l.b16 %v883
          %v952 = vunpack.c.l.b16 %v884
          %v953 = vunpack.c.l.b16 %v885
          %v954 = vunpack.c.l.b16 %v886
          %v955 = vunpack.c.l.b16 %v887
          %v956 = vunpack.c.l.b16 %v888
          %v957 = vunpack.c.l.b16 %v889
          %v958 = vunpack.c.l.b16 %v890
          %v959 = vunpack.c.l.b16 %v891
          %v960 = vunpack.c.l.b16 %v892
          %v961 = vunpack.c.l.b16 %v893
          %v962 = vunpack.c.l.b16 %v894
          %v963 = vunpack.c.l.b16 %v895
          %v964 = vunpack.c.l.b16 %v896
          %v965 = vunpack.c.l.b16 %v897
          %v966 = vunpack.c.l.b16 %v898
          %v967 = vunpack.c.l.b16 %v899
          %v968 = vpack.c.b16 %v937, %v936
          %v969 = vpack.c.b16 %v939, %v938
          %v970 = vpack.c.b16 %v941, %v940
          %v971 = vpack.c.b16 %v943, %v942
          %v972 = vpack.c.b16 %v945, %v944
          %v973 = vpack.c.b16 %v947, %v946
          %v974 = vpack.c.b16 %v949, %v948
          %v975 = vpack.c.b16 %v951, %v950
          %v976 = vpack.c.b16 %v953, %v952
          %v977 = vpack.c.b16 %v955, %v954
          %v978 = vpack.c.b16 %v957, %v956
          %v979 = vpack.c.b16 %v959, %v958
          %v980 = vpack.c.b16 %v961, %v960
          %v981 = vpack.c.b16 %v963, %v962
          %v982 = vpack.c.b16 %v965, %v964
          %v983 = vpack.c.b16 %v967, %v966
          %1000 = vmatpush.bf16.msra.mxu0 %v975
          %1001 = vmatpush.bf16.msra.mxu0 %v974
          %1002 = vmatpush.bf16.msra.mxu0 %v973
          %1003 = vmatpush.bf16.msra.mxu0 %v972
          %1004 = vmatpush.bf16.msra.mxu0 %v971
          %1005 = vmatpush.bf16.msra.mxu0 %v970
          %1006 = vmatpush.bf16.msra.mxu0 %v969
          %1007 = vmatpush.bf16.msra.mxu0 %v968
          %1008 = vmatmul.bf16.gmra.mxu0 %v864
          %v1009 = vpop.f32.mrf.mxu0
          %v1010 = vadd.f32 %v902, %v1009
          %v1011 = vpop.f32.mrf.mxu0
          %v1012 = vadd.f32 %v902, %v1011
          %1013 = vmatmul.bf16.gmra.mxu0 %v866
          %v1014 = vpop.f32.mrf.mxu0
          %v1015 = vadd.f32 %v902, %v1014
          %v1016 = vpop.f32.mrf.mxu0
          %v1017 = vadd.f32 %v902, %v1016
          %1018 = vdwg.mxu0
          %1019 = vmatpush.bf16.msra.mxu0 %v983
          %1020 = vmatpush.bf16.msra.mxu0 %v982
          %1021 = vmatpush.bf16.msra.mxu0 %v981
          %1022 = vmatpush.bf16.msra.mxu0 %v980
          %1023 = vmatpush.bf16.msra.mxu0 %v979
          %1024 = vmatpush.bf16.msra.mxu0 %v978
          %1025 = vmatpush.bf16.msra.mxu0 %v977
          %1026 = vmatpush.bf16.msra.mxu0 %v976
          %1027 = vmatmul.bf16.gmra.mxu0 %v865
          %v1028 = vpop.f32.mrf.mxu0
          %v1029 = vadd.f32 %v1010, %v1028
          %v1030 = vpop.f32.mrf.mxu0
          %v1031 = vadd.f32 %v1012, %v1030
          %1032 = vmatmul.bf16.gmra.mxu0 %v867
          %v1033 = vpop.f32.mrf.mxu0
          %v1034 = vadd.f32 %v1015, %v1033
          %v1035 = vpop.f32.mrf.mxu0
          %v1036 = vadd.f32 %v1017, %v1035
          %1037 = vdwg.mxu0
          %vm1038 = vcmp.gt.f32.partialorder %v1029, 0.0
          %vm1039 = vcmp.gt.f32.partialorder %v1031, 0.0
          %vm1040 = vcmp.gt.f32.partialorder %v1034, 0.0
          %vm1041 = vcmp.gt.f32.partialorder %v1036, 0.0
          %v1042 = vmul.f32 %v1029, 0.25
          %v1043 = vmul.f32 %v1031, 0.25
          %v1044 = vmul.f32 %v1034, 0.25
          %v1045 = vmul.f32 %v1036, 0.25
          %v1046 = vsel %vm1038, %v1029, %v1042
          %v1047 = vsel %vm1039, %v1031, %v1043
          %v1048 = vsel %vm1040, %v1034, %v1044
          %v1049 = vsel %vm1041, %v1036, %v1045
          %v1050 = vpack.c.bf16 %v1047, %v1046
          %v1051 = vpack.c.bf16 %v1049, %v1048
          %v1052 = vld [vmem:[#allocation11] sm:$0xf]
          %v1053 = vld [vmem:[#allocation11 + $0x4] sm:$0xf]
          %v1054 = vld [vmem:[#allocation11 + $0x8] sm:$0xf]
          %v1055 = vld [vmem:[#allocation11 + $0xc] sm:$0xf]
          %v1056 = vld [vmem:[#allocation11 + $0x10] sm:$0xf]
          %v1057 = vld [vmem:[#allocation11 + $0x14] sm:$0xf]
          %v1058 = vld [vmem:[#allocation11 + $0x18] sm:$0xf]
          %v1059 = vld [vmem:[#allocation11 + $0x1c] sm:$0xf]
          %v1060 = vld [vmem:[#allocation11 + $0x20] sm:$0xf]
          %v1061 = vld [vmem:[#allocation11 + $0x24] sm:$0xf]
          %v1062 = vld [vmem:[#allocation11 + $0x28] sm:$0xf]
          %v1063 = vld [vmem:[#allocation11 + $0x2c] sm:$0xf]
          %v1064 = vld [vmem:[#allocation11 + $0x30] sm:$0xf]
          %v1065 = vld [vmem:[#allocation11 + $0x34] sm:$0xf]
          %v1066 = vld [vmem:[#allocation11 + $0x38] sm:$0xf]
          %v1067 = vld [vmem:[#allocation11 + $0x3c] sm:$0xf]
          %v1068 = vld [vmem:[%s7] sm:$0x1]
          %v1070 = vperm.slane %v1068, 0
          %v1088 = vunpack.c.l.b16 %v1052
          %v1089 = vunpack.c.l.b16 %v1053
          %v1090 = vunpack.c.l.b16 %v1054
          %v1091 = vunpack.c.l.b16 %v1055
          %v1092 = vunpack.c.l.b16 %v1056
          %v1093 = vunpack.c.l.b16 %v1057
          %v1094 = vunpack.c.l.b16 %v1058
          %v1095 = vunpack.c.l.b16 %v1059
          %v1096 = vunpack.c.l.b16 %v1060
          %v1097 = vunpack.c.l.b16 %v1061
          %v1098 = vunpack.c.l.b16 %v1062
          %v1099 = vunpack.c.l.b16 %v1063
          %v1100 = vunpack.c.l.b16 %v1064
          %v1101 = vunpack.c.l.b16 %v1065
          %v1102 = vunpack.c.l.b16 %v1066
          %v1103 = vunpack.c.l.b16 %v1067
          %v1104 = vpack.c.b16 %v1089, %v1088
          %v1105 = vpack.c.b16 %v1091, %v1090
          %v1106 = vpack.c.b16 %v1093, %v1092
          %v1107 = vpack.c.b16 %v1095, %v1094
          %v1108 = vpack.c.b16 %v1097, %v1096
          %v1109 = vpack.c.b16 %v1099, %v1098
          %v1110 = vpack.c.b16 %v1101, %v1100
          %v1111 = vpack.c.b16 %v1103, %v1102
          %1120 = vmatpush.bf16.msra.mxu0 %v1111
          %1121 = vmatpush.bf16.msra.mxu0 %v1110
          %1122 = vmatpush.bf16.msra.mxu0 %v1109
          %1123 = vmatpush.bf16.msra.mxu0 %v1108
          %1124 = vmatpush.bf16.msra.mxu0 %v1107
          %1125 = vmatpush.bf16.msra.mxu0 %v1106
          %1126 = vmatpush.bf16.msra.mxu0 %v1105
          %1127 = vmatpush.bf16.msra.mxu0 %v1104
          %1128 = vmatmul.bf16.gmra.mxu0 %v1050
          %v1129 = vpop.f32.mrf.mxu0
          %v1130 = vadd.f32 %v1070, %v1129
          %v1131 = vpop.f32.mrf.mxu0
          %v1132 = vadd.f32 %v1070, %v1131
          %1133 = vmatmul.bf16.gmra.mxu0 %v1051
          %v1134 = vpop.f32.mrf.mxu0
          %v1135 = vadd.f32 %v1070, %v1134
          %v1136 = vpop.f32.mrf.mxu0
          %v1137 = vadd.f32 %v1070, %v1136
          %1138 = vdwg.mxu0
          %1139 = vst [vmem:[#allocation12] sm:$0xff] %v1130
          %1140 = vst [vmem:[#allocation12 + $0x8] sm:$0xff] %v1132
          %1141 = vst [vmem:[#allocation13] sm:$0xff] %v1135
          %1142 = vst [vmem:[#allocation13 + $0x8] sm:$0xff] %v1137
        $region80: #{tpu_custom_call.1} parent=51 // pred_fallthru
          _
        // Predicated region
        $region81: #{tpu_custom_call.1} parent=51 // pred_check
          %p1143 = pneg %p247
        $region82: #{tpu_custom_call.1} parent=51 // pred_check_branch
          %1145 = sbr.rel (%p1143) target = $region84
        $region83: #{tpu_custom_call.1} parent=51 // pred_region
          %s1146 = smul.u32 2, %s34
          %1148 = vsyncadd [#allocation5], 0
          %s1149 = smul.addr %s1146, 8
          %s1150 = scalar_lea.hbm %s8, %s1149
          %s1151 = sshll.u32 [#allocation12], 4
          %s1152 = int_to_ptr.vmem [resolvable:$true] %s1151
          %s1153 = sshll.u32 %s1150, 4
          %s1154 = int_to_ptr.hbm [resolvable:$true] %s1153
          %1159 = dma.vmem_to_hbm [thread:$0]  %s1152, 256, %s1154, [#allocation5], 128, 128, 8
        $region84: #{tpu_custom_call.1} parent=51 // pred_fallthru
          _
        // Predicated region
        $region85: #{tpu_custom_call.1} parent=51 // pred_check
          %p1160 = pneg %p273
        $region86: #{tpu_custom_call.1} parent=51 // pred_check_branch
          %1162 = sbr.rel (%p1160) target = $region88
        $region87: #{tpu_custom_call.1} parent=51 // pred_region
          %s1163 = smul.u32 2, %s34
          %1165 = vsyncadd [#allocation14], 0
          %s1166 = smul.addr %s1163, 8
          %s1167 = scalar_lea.hbm %s9, %s1166
          %s1168 = sshll.u32 [#allocation13], 4
          %s1169 = int_to_ptr.vmem [resolvable:$true] %s1168
          %s1170 = sshll.u32 %s1167, 4
          %s1171 = int_to_ptr.hbm [resolvable:$true] %s1170
          %1176 = dma.vmem_to_hbm [thread:$0]  %s1169, 256, %s1171, [#allocation14], 128, 128, 8
        $region88: #{tpu_custom_call.1} parent=51 // pred_fallthru
          _
        // Predicated region
        $region89: #{tpu_custom_call.1} parent=51 // pred_check
          %p1177 = pneg %p247
        $region90: #{tpu_custom_call.1} parent=51 // pred_check_branch
          %1179 = sbr.rel (%p1177) target = $region92
        $region91: #{tpu_custom_call.1} parent=51 // pred_region
          %1181 = dma.done [#allocation5], 256
        $region92: #{tpu_custom_call.1} parent=51 // pred_fallthru
          _
        // Predicated region
        $region93: #{tpu_custom_call.1} parent=51 // pred_check
          %p1182 = pneg %p273
        $region94: #{tpu_custom_call.1} parent=51 // pred_check_branch
          %1184 = sbr.rel (%p1182) target = $region96
        $region95: #{tpu_custom_call.1} parent=51 // pred_region
          %1186 = dma.done [#allocation14], 256
        $region96: #{tpu_custom_call.1} parent=51 // pred_fallthru
          _
      $region52: #{tpu_custom_call.1} parent=5 // pred_fallthru
        _
      %p1187 = scmp.le.s32.totalorder 2, %s25
      // Predicated region
      $region97: #{tpu_custom_call.1} parent=5 // pred_check
        %p1188 = pneg %p1187
      $region98: #{tpu_custom_call.1} parent=5 // pred_check_branch
        %1190 = sbr.rel (%p1188) target = $region100
      $region99: #{tpu_custom_call.1} parent=5 // pred_region
        %s1191 = ssub.s32 %s25, 2
      $region100: #{tpu_custom_call.1} parent=5 // pred_fallthru
        _
    $region6: #{tpu_custom_call.1} parent=1 // loop_footer
      %s29 = sadd.s32 1, %s25
    $region7: #{tpu_custom_call.1} parent=1 // loop_footer_branch
      %24 = sbr.rel target = $region3
    $region8: #{tpu_custom_call.1} parent=1 // loop_exit
      _
    %1192 = vsyncpa [#allocation4], 1
    %s1193 = scalar_lea.sflag [#allocation4], 1
    %1194 = vsyncpa %s1193, 1
    %1195 = vsyncpa [#allocation7], 1
    %s1196 = scalar_lea.sflag [#allocation7], 1
    %1197 = vsyncpa %s1196, 1
    %1198 = vsyncpa [#allocation10], 1
    %1199 = vsyncpa [#allocation5], 1
    %s1200 = scalar_lea.sflag [#allocation5], 1
    %1201 = vsyncpa %s1200, 1
    %1202 = vsyncpa [#allocation14], 1

</llo_original>
